<compile_context>
chip_gen: v5e
topology: v5e:2x2
jax: 0.10.0
libtpu: 0.0.40
codegen_flags: <defaults>
</compile_context>

<pallas_src>
import jax
import jax.numpy as jnp
from jax.experimental import pallas as pl
from jax.experimental.pallas import tpu as pltpu

_LANE = 128


def _round_up(n, m):
    return (n + m - 1) // m * m


def _cdiv(a, b):
    return (a + b - 1) // b


def _num_tensorcores_per_chip():
    """2 on v7x (dual TensorCore per chip), 1 on v5e/v6e (and as a safe default)."""
    try:
        kind = jax.devices()[0].device_kind.lower()
    except Exception:
        return 1
    return 2 if ("v7" in kind or "tpu7" in kind or "7x" in kind) else 1


def _pick_block_b(B, Fp, x_itemsize):
    """Minimize grid steps: 1 step on 1-TC chips, an even count on 2-TC v7x, while
    capping the per-step x tile at ~8 MiB so huge B / n_features still pipeline."""
    n_tc = _num_tensorcores_per_chip()
    max_rows = (8 << 20) // max(1, Fp * x_itemsize)
    max_rows = max(256, (max_rows // 8) * 8)
    nb = max(n_tc, _cdiv(B, max_rows))
    if nb % n_tc:
        nb += n_tc - (nb % n_tc)          # even step count on v7x -> both TCs busy
    return _round_up(_cdiv(B, nb), 8)


def _make_mlp_kernel(depth):
    """Fused MLP kernel for a fixed `depth` of hidden Linear+ReLU(+Dropout) layers."""

    def kernel(x_ref, w_in_ref, b_in_ref, w_h_ref, b_h_ref,
               w_out_ref, b_out_ref, o_ref):
        # in_map: cast the f32 x tile to bf16 in-register (no wrapper pass), then
        # (tb, Fp) bf16 @ (Fp, Wp) bf16 -> f32 accumulate, f32 bias add.
        x = x_ref[...].astype(jnp.bfloat16)
        h = jnp.dot(x, w_in_ref[...],
                    preferred_element_type=jnp.float32) + b_in_ref[...]

        # hidden stack: Linear -> ReLU -> Dropout (identity, eval mode).
        # Static unroll is fine for small depth; switch to lax.fori_loop with dynamic
        # w_h_ref[i] indexing if depth grows large (>= 8).
        for i in range(depth):
            h = jnp.dot(h.astype(jnp.bfloat16), w_h_ref[i],
                        preferred_element_type=jnp.float32) + b_h_ref[i]
            h = jnp.maximum(h, 0.0)

        # out_map: (tb, Wp) @ (Wp, 128) into a lane-dense tile; the real result lives
        # in lane 0, remaining 127 lanes are zero padding.  Accumulation and bias add
        # stay f32; only the store narrows to bf16 to halve output HBM bytes.
        y = jnp.dot(h.astype(jnp.bfloat16), w_out_ref[...],
                    preferred_element_type=jnp.float32) + b_out_ref[...]
        o_ref[...] = y.astype(o_ref.dtype)

    return kernel


def pack_mlp_params(params, *, depth):
    """One-time packing of the MLP params (hoisted out of the forward path).

    Pads feature/width dims to 128 lanes, stacks the hidden layers into single
    (depth, Wp, Wp) / (depth, 1, Wp) arrays (2 DMA streams instead of 2*depth) and
    casts weights to bf16 (MXU-native); biases stay f32."""
    F, W = params["w_in"].shape
    Fp, Wp = _round_up(F, _LANE), _round_up(W, _LANE)

    w_in = jnp.zeros((Fp, Wp), jnp.bfloat16).at[:F, :W].set(
        params["w_in"].astype(jnp.bfloat16))
    b_in = jnp.zeros((1, Wp), jnp.float32).at[:, :W].set(params["b_in"])

    w_h_nat = jnp.stack(params["w_h"])          # (depth, W, W)
    b_h_nat = jnp.stack(params["b_h"])          # (depth, 1, W)
    w_h = jnp.zeros((depth, Wp, Wp), jnp.bfloat16).at[:, :W, :W].set(
        w_h_nat.astype(jnp.bfloat16))
    b_h = jnp.zeros((depth, 1, Wp), jnp.float32).at[:, :, :W].set(b_h_nat)

    # out_map weight padded to a lane-dense (Wp, 128) tile; real column is lane 0.
    w_out = jnp.zeros((Wp, _LANE), jnp.bfloat16).at[:W, :1].set(
        params["w_out"].astype(jnp.bfloat16))
    b_out = jnp.zeros((1, _LANE), jnp.float32).at[:, :1].set(params["b_out"])

    return dict(w_in=w_in, b_in=b_in, w_h=w_h, b_h=b_h, w_out=w_out, b_out=b_out)


def mlp_forward_pallas(x, packed, *, block_b=None):
    """Fused MLP forward pass (eval mode).

    x:      (B, n_features) float32
    packed: output of pack_mlp_params (call once; reuse across forward calls)
    Returns (B, 1) float32.
    """
    B, F = x.shape
    Fp, Wp = packed["w_in"].shape
    depth = packed["w_h"].shape[0]
    assert depth >= 1
    assert F <= Fp

    if block_b is None:
        block_b = _pick_block_b(B, Fp, x.dtype.itemsize)
    block_b = _round_up(block_b, 8)
    Bp = _round_up(B, block_b)
    nb = Bp // block_b

    # Pad only when B/F are not already aligned; no-op (zero extra HBM passes) for
    # aligned inputs like the demo shapes.
    if Bp != B or Fp != F:
        x = jnp.pad(x, ((0, Bp - B), (0, Fp - F)))

    # VMEM budget from the actual footprint (double-buffered x/out tiles, resident
    # weights, f32 intermediates) with ~2x headroom for compiler scratch.
    w_bytes = sum(int(v.size) * v.dtype.itemsize for v in packed.values())
    x_tile = block_b * Fp * x.dtype.itemsize
    out_tile = block_b * _LANE * 2                      # bf16 output tile
    act_bytes = 2 * block_b * Wp * 4                    # live f32 activations
    vmem_limit = int(max(8 << 20,
                         min(64 << 20,
                             2 * (2 * x_tile + 2 * out_tile + 2 * w_bytes + act_bytes)
                             + (2 << 20))))

    kernel = _make_mlp_kernel(depth)

    out = pl.pallas_call(
        kernel,
        out_shape=jax.ShapeDtypeStruct((Bp, _LANE), jnp.bfloat16),
        grid_spec=pltpu.PrefetchScalarGridSpec(
            num_scalar_prefetch=0,
            grid=(nb,),
            in_specs=[
                # x: the only operand whose block changes per grid step.
                pl.BlockSpec((block_b, Fp), lambda i: (i, 0)),
                # Weights/biases: constant index_map -> fetched once, kept resident.
                pl.BlockSpec((Fp, Wp), lambda i: (0, 0)),            # w_in
                pl.BlockSpec((1, Wp), lambda i: (0, 0)),             # b_in
                pl.BlockSpec((depth, Wp, Wp), lambda i: (0, 0, 0)),  # packed hidden W
                pl.BlockSpec((depth, 1, Wp), lambda i: (0, 0, 0)),   # packed hidden b
                pl.BlockSpec((Wp, _LANE), lambda i: (0, 0)),         # w_out (padded)
                pl.BlockSpec((1, _LANE), lambda i: (0, 0)),          # b_out (padded)
            ],
            # Lane-dense bf16 output tile: full unmasked vector stores.
            out_specs=pl.BlockSpec((block_b, _LANE), lambda i: (i, 0)),
        ),
        compiler_params=pltpu.CompilerParams(
            dimension_semantics=("parallel",),   # batch axis shards across TCs (v7x)
            vmem_limit_bytes=vmem_limit,
        ),
    )(x, packed["w_in"], packed["b_in"], packed["w_h"], packed["b_h"],
      packed["w_out"], packed["b_out"])

    # Strip batch padding and the 127 zero padding lanes; return f32 like the module.
    return out[:B, :1].astype(jnp.float32)


def init_mlp_params(key, n_features, width, depth):
    """Deterministic init mimicking nn.Linear's U(-1/sqrt(fan_in), 1/sqrt(fan_in))."""
    def linear(key, fan_in, fan_out):
        kw, kb = jax.random.split(key)
        bound = 1.0 / jnp.sqrt(jnp.float32(fan_in))
        w = jax.random.uniform(kw, (fan_in, fan_out), jnp.float32, -bound, bound)
        b = jax.random.uniform(kb, (1, fan_out), jnp.float32, -bound, bound)
        return w, b

    keys = jax.random.split(key, depth + 2)
    w_in, b_in = linear(keys[0], n_features, width)
    w_h, b_h = [], []
    for i in range(depth):
        w, b = linear(keys[1 + i], width, width)
        w_h.append(w)
        b_h.append(b)
    w_out, b_out = linear(keys[depth + 1], width, 1)
    return dict(w_in=w_in, b_in=b_in, w_h=w_h, b_h=b_h, w_out=w_out, b_out=b_out)


def mlp_forward_ref(x, params, *, depth):
    """Pure-JAX f32 reference matching the PyTorch forward (eval mode)."""
    h = x @ params["w_in"] + params["b_in"]
    for i in range(depth):
        h = jnp.maximum(h @ params["w_h"][i] + params["b_h"][i], 0.0)
    return h @ params["w_out"] + params["b_out"]


if __name__ == "__main__":
    # Modest shapes consistent with the module (width=32, depth=2); B/F already
    # (8,128)-aligned so the wrapper does zero padding work.
    B, F, WIDTH, DEPTH = 512, 256, 32, 2

    key = jax.random.PRNGKey(0)
    k_params, k_x = jax.random.split(key)

    params = init_mlp_params(k_params, F, WIDTH, DEPTH)
    x = jax.random.normal(k_x, (B, F), jnp.float32)

    # One-time packing, hoisted out of the forward path (reused across calls).
    packed = pack_mlp_params(params, depth=DEPTH)

    out = mlp_forward_pallas(x, packed)
    out = jax.block_until_ready(out)

    ref = mlp_forward_ref(x, params, depth=DEPTH)
    assert out.shape == (B, 1)
    # bf16 matmuls (f32 accumulation) + bf16 output store vs f32 reference.
    assert jnp.allclose(out, ref, atol=4e-2, rtol=4e-2), "mismatch vs reference"

    print("KERNEL_OK")
</pallas_src>

<mosaic_0001>
module attributes {stable_mosaic.version = 11 : i64} {
  func.func @kernel(%arg0: i32, %arg1: memref<512x256xf32, #tpu.memory_space<vmem>>, %arg2: memref<256x128xbf16, #tpu.memory_space<vmem>>, %arg3: memref<1x128xf32, #tpu.memory_space<vmem>>, %arg4: memref<2x128x128xbf16, #tpu.memory_space<vmem>>, %arg5: memref<2x1x128xf32, #tpu.memory_space<vmem>>, %arg6: memref<128x128xbf16, #tpu.memory_space<vmem>>, %arg7: memref<1x128xf32, #tpu.memory_space<vmem>>, %arg8: memref<512x128xbf16, #tpu.memory_space<vmem>>) attributes {dimension_semantics = [#tpu.dimension_semantics<parallel>], iteration_bounds = array<i64: 1>, scalar_prefetch = 0 : i64, scratch_operands = 0 : i64, tpu.core_type = #tpu.core_type<tc>, window_params = [{transform_indices = @transform_0, window_bounds = array<i64: 512, 256>}, {pipeline_mode = #tpu.pipeline_mode<synchronous>, transform_indices = @transform_1, window_bounds = array<i64: 256, 128>}, {pipeline_mode = #tpu.pipeline_mode<synchronous>, transform_indices = @transform_2, window_bounds = array<i64: 1, 128>}, {pipeline_mode = #tpu.pipeline_mode<synchronous>, transform_indices = @transform_3, window_bounds = array<i64: 2, 128, 128>}, {pipeline_mode = #tpu.pipeline_mode<synchronous>, transform_indices = @transform_4, window_bounds = array<i64: 2, 1, 128>}, {pipeline_mode = #tpu.pipeline_mode<synchronous>, transform_indices = @transform_5, window_bounds = array<i64: 128, 128>}, {pipeline_mode = #tpu.pipeline_mode<synchronous>, transform_indices = @transform_6, window_bounds = array<i64: 1, 128>}, {transform_indices = @transform_7, window_bounds = array<i64: 512, 128>}]} {
    %c0 = arith.constant 0 : index
    %c0_0 = arith.constant 0 : index
    %0 = vector.load %arg1[%c0, %c0_0] : memref<512x256xf32, #tpu.memory_space<vmem>>, vector<512x256xf32>
    %1 = arith.truncf %0 : vector<512x256xf32> to vector<512x256xbf16>
    %c0_1 = arith.constant 0 : index
    %c0_2 = arith.constant 0 : index
    %2 = vector.load %arg2[%c0_1, %c0_2] : memref<256x128xbf16, #tpu.memory_space<vmem>>, vector<256x128xbf16>
    %cst = arith.constant dense<0.000000e+00> : vector<512x128xf32>
    %3 = tpu.matmul %1, %2, %cst {dimension_numbers = #tpu.dot_dimension_numbers<[1], [0], [0], [1], [0, 0, 1, 1], [], []>} : vector<512x256xbf16>, vector<256x128xbf16>, vector<512x128xf32> -> vector<512x128xf32>
    %c0_3 = arith.constant 0 : index
    %c0_4 = arith.constant 0 : index
    %4 = vector.load %arg3[%c0_3, %c0_4] : memref<1x128xf32, #tpu.memory_space<vmem>>, vector<1x128xf32>
    %5 = vector.broadcast %4 : vector<1x128xf32> to vector<512x128xf32>
    %6 = arith.addf %3, %5 : vector<512x128xf32>
    %7 = arith.truncf %6 : vector<512x128xf32> to vector<512x128xbf16>
    %c0_5 = arith.constant 0 : index
    %c0_6 = arith.constant 0 : index
    %c0_7 = arith.constant 0 : index
    %8 = vector.load %arg4[%c0_5, %c0_6, %c0_7] : memref<2x128x128xbf16, #tpu.memory_space<vmem>>, vector<1x128x128xbf16>
    %9 = vector.shape_cast %8 : vector<1x128x128xbf16> to vector<128x128xbf16>
    %cst_8 = arith.constant dense<0.000000e+00> : vector<512x128xf32>
    %10 = tpu.matmul %7, %9, %cst_8 {dimension_numbers = #tpu.dot_dimension_numbers<[1], [0], [0], [1], [0, 0, 1, 1], [], []>} : vector<512x128xbf16>, vector<128x128xbf16>, vector<512x128xf32> -> vector<512x128xf32>
    %c0_9 = arith.constant 0 : index
    %c0_10 = arith.constant 0 : index
    %c0_11 = arith.constant 0 : index
    %11 = vector.load %arg5[%c0_9, %c0_10, %c0_11] : memref<2x1x128xf32, #tpu.memory_space<vmem>>, vector<1x1x128xf32>
    %12 = vector.shape_cast %11 : vector<1x1x128xf32> to vector<1x128xf32>
    %13 = vector.broadcast %12 : vector<1x128xf32> to vector<512x128xf32>
    %14 = arith.addf %10, %13 : vector<512x128xf32>
    %cst_12 = arith.constant 0.000000e+00 : f32
    %15 = vector.broadcast %cst_12 : f32 to vector<512x128xf32>
    %16 = arith.maximumf %14, %15 : vector<512x128xf32>
    %17 = arith.truncf %16 : vector<512x128xf32> to vector<512x128xbf16>
    %c1 = arith.constant 1 : index
    %c0_13 = arith.constant 0 : index
    %c0_14 = arith.constant 0 : index
    %18 = vector.load %arg4[%c1, %c0_13, %c0_14] : memref<2x128x128xbf16, #tpu.memory_space<vmem>>, vector<1x128x128xbf16>
    %19 = vector.shape_cast %18 : vector<1x128x128xbf16> to vector<128x128xbf16>
    %cst_15 = arith.constant dense<0.000000e+00> : vector<512x128xf32>
    %20 = tpu.matmul %17, %19, %cst_15 {dimension_numbers = #tpu.dot_dimension_numbers<[1], [0], [0], [1], [0, 0, 1, 1], [], []>} : vector<512x128xbf16>, vector<128x128xbf16>, vector<512x128xf32> -> vector<512x128xf32>
    %c1_16 = arith.constant 1 : index
    %c0_17 = arith.constant 0 : index
    %c0_18 = arith.constant 0 : index
    %21 = vector.load %arg5[%c1_16, %c0_17, %c0_18] : memref<2x1x128xf32, #tpu.memory_space<vmem>>, vector<1x1x128xf32>
    %22 = vector.shape_cast %21 : vector<1x1x128xf32> to vector<1x128xf32>
    %23 = vector.broadcast %22 : vector<1x128xf32> to vector<512x128xf32>
    %24 = arith.addf %20, %23 : vector<512x128xf32>
    %cst_19 = arith.constant 0.000000e+00 : f32
    %25 = vector.broadcast %cst_19 : f32 to vector<512x128xf32>
    %26 = arith.maximumf %24, %25 : vector<512x128xf32>
    %27 = arith.truncf %26 : vector<512x128xf32> to vector<512x128xbf16>
    %c0_20 = arith.constant 0 : index
    %c0_21 = arith.constant 0 : index
    %28 = vector.load %arg6[%c0_20, %c0_21] : memref<128x128xbf16, #tpu.memory_space<vmem>>, vector<128x128xbf16>
    %cst_22 = arith.constant dense<0.000000e+00> : vector<512x128xf32>
    %29 = tpu.matmul %27, %28, %cst_22 {dimension_numbers = #tpu.dot_dimension_numbers<[1], [0], [0], [1], [0, 0, 1, 1], [], []>} : vector<512x128xbf16>, vector<128x128xbf16>, vector<512x128xf32> -> vector<512x128xf32>
    %c0_23 = arith.constant 0 : index
    %c0_24 = arith.constant 0 : index
    %30 = vector.load %arg7[%c0_23, %c0_24] : memref<1x128xf32, #tpu.memory_space<vmem>>, vector<1x128xf32>
    %31 = vector.broadcast %30 : vector<1x128xf32> to vector<512x128xf32>
    %32 = arith.addf %29, %31 : vector<512x128xf32>
    %33 = arith.truncf %32 : vector<512x128xf32> to vector<512x128xbf16>
    %c0_25 = arith.constant 0 : index
    %c0_26 = arith.constant 0 : index
    %34 = vector.load %arg8[%c0_25, %c0_26] : memref<512x128xbf16, #tpu.memory_space<vmem>>, vector<512x128xbf16>
    tpu.vector_store %arg8[%c0_25, %c0_26], %33 {strides = array<i32>} : memref<512x128xbf16, #tpu.memory_space<vmem>>, vector<512x128xbf16>,
    return
  }
  func.func @transform_0(%arg0: i32) -> (i32, i32) {
    %c0_i32 = arith.constant 0 : i32
    %c0_i32_0 = arith.constant 0 : i32
    return %arg0, %c0_i32 : i32, i32
  }
  func.func @transform_1(%arg0: i32) -> (i32, i32) {
    %c0_i32 = arith.constant 0 : i32
    %c0_i32_0 = arith.constant 0 : i32
    %c0_i32_1 = arith.constant 0 : i32
    return %c0_i32, %c0_i32_0 : i32, i32
  }
  func.func @transform_2(%arg0: i32) -> (i32, i32) {
    %c0_i32 = arith.constant 0 : i32
    %c0_i32_0 = arith.constant 0 : i32
    %c0_i32_1 = arith.constant 0 : i32
    return %c0_i32, %c0_i32_0 : i32, i32
  }
  func.func @transform_3(%arg0: i32) -> (i32, i32, i32) {
    %c0_i32 = arith.constant 0 : i32
    %c0_i32_0 = arith.constant 0 : i32
    %c0_i32_1 = arith.constant 0 : i32
    %c0_i32_2 = arith.constant 0 : i32
    return %c0_i32, %c0_i32_0, %c0_i32_1 : i32, i32, i32
  }
  func.func @transform_4(%arg0: i32) -> (i32, i32, i32) {
    %c0_i32 = arith.constant 0 : i32
    %c0_i32_0 = arith.constant 0 : i32
    %c0_i32_1 = arith.constant 0 : i32
    %c0_i32_2 = arith.constant 0 : i32
    return %c0_i32, %c0_i32_0, %c0_i32_1 : i32, i32, i32
  }
  func.func @transform_5(%arg0: i32) -> (i32, i32) {
    %c0_i32 = arith.constant 0 : i32
    %c0_i32_0 = arith.constant 0 : i32
    %c0_i32_1 = arith.constant 0 : i32
    return %c0_i32, %c0_i32_0 : i32, i32
  }
  func.func @transform_6(%arg0: i32) -> (i32, i32) {
    %c0_i32 = arith.constant 0 : i32
    %c0_i32_0 = arith.constant 0 : i32
    %c0_i32_1 = arith.constant 0 : i32
    return %c0_i32, %c0_i32_0 : i32, i32
  }
  func.func @transform_7(%arg0: i32) -> (i32, i32) {
    %c0_i32 = arith.constant 0 : i32
    %c0_i32_0 = arith.constant 0 : i32
    return %arg0, %c0_i32 : i32, i32
  }
}

</mosaic_0001>

<llo_original>
// kernel: tpu_custom_call.1
$region0: #{tpu_custom_call.1}
  #allocation0 [shape = 'u32[]', space=smem, size = 0x4, offset = 0x4, fixed_abs, tag = 'smem constant byte address 0x4 - core index']
  #allocation1 [shape = 'u32[72,128]{1,0:T(1,128)}', space=vmem, size = 0x9000, scoped, tag = 'internal scratch']
  %s0 = inlined_call_operand.hbm [shape: f32[512,256], index: 0, kind: input, shape index: {}]
  %s1 = inlined_call_operand.hbm [shape: bf16[256,128], index: 1, kind: input, shape index: {}]
  %s2 = inlined_call_operand.vmem [shape: f32[1,128], index: 2, kind: input, shape index: {}]
  %s3 = inlined_call_operand.hbm [shape: bf16[2,128,128], index: 3, kind: input, shape index: {}]
  %s4 = inlined_call_operand.vmem [shape: f32[2,1,128], index: 4, kind: input, shape index: {}]
  %s5 = inlined_call_operand.hbm [shape: bf16[128,128], index: 5, kind: input, shape index: {}]
  %s6 = inlined_call_operand.vmem [shape: f32[1,128], index: 6, kind: input, shape index: {}]
  %s7 = inlined_call_operand.hbm [shape: bf16[512,128], index: 7, kind: output, shape index: {}]
  %s8 = sld [smem:[#allocation0]]
  $region54: #{tpu_custom_call.1} parent=0
    _
  %s10 = ssub.s32 1, %s8
  %s11 = scalar_select 0, %s10, %s8
  $region1: #{tpu_custom_call.1} parent=0
    #allocation2 [shape = 'u8[524288]{0}', space=vmem, size = 0x80000, scoped, tag = 'input window, operand 0, single buffered']
    #allocation3 [shape = 's32[1]{0}', space=sflag, size = 0x4, scoped, tag = 'scoped memory for tpu_custom_call.1']
    #allocation4 [shape = 's32[1]{0}', space=sflag, size = 0x4, scoped, tag = 'scoped memory for tpu_custom_call.1']
    #allocation5 [shape = 'u8[65536]{0}', space=vmem, size = 0x10000, scoped, tag = 'input window, operand 1, single buffered']
    #allocation6 [shape = 's32[1]{0}', space=sflag, size = 0x4, scoped, tag = 'scoped memory for tpu_custom_call.1']
    #allocation7 [shape = 'u8[65536]{0}', space=vmem, size = 0x10000, scoped, tag = 'input window, operand 3, single buffered']
    #allocation8 [shape = 'u8[32768]{0}', space=vmem, size = 0x8000, scoped, tag = 'input window, operand 5, single buffered']
    #allocation9 [shape = 's32[1]{0}', space=sflag, size = 0x4, scoped, tag = 'scoped memory for tpu_custom_call.1']
    #allocation10 [shape = 'u8[131072]{0}', space=vmem, size = 0x20000, scoped, tag = 'output window, operand 0, single buffered']
    %12 = vsyncpa [#allocation3], 0
    %13 = vsyncpa [#allocation6], 0
    %14 = vsyncpa [#allocation9], 0
    %15 = vsyncpa [#allocation4], 0
    // Predicated region
    $region2: #{tpu_custom_call.1} parent=1 // pred_check
      _
    $region3: #{tpu_custom_call.1} parent=1 // pred_check_branch
      %17 = sbr.rel (0) target = $region5
    $region4: #{tpu_custom_call.1} parent=1 // pred_region
      %19 = vsyncadd [#allocation3], 0
      %s20 = sshll.u32 %s0, 4
      %s21 = int_to_ptr.hbm [resolvable:$true] %s20
      %s22 = sshll.u32 [#allocation2], 4
      %s23 = int_to_ptr.vmem [resolvable:$true] %s22
      %28 = dma.hbm_to_vmem [thread:$0]  %s21, 16384, %s23, [#allocation3], 256, 256, 16
    $region5: #{tpu_custom_call.1} parent=1 // pred_fallthru
      _
    // Predicated region
    $region6: #{tpu_custom_call.1} parent=1 // pred_check
      _
    $region7: #{tpu_custom_call.1} parent=1 // pred_check_branch
      %30 = sbr.rel (0) target = $region9
    $region8: #{tpu_custom_call.1} parent=1 // pred_region
      %32 = vsyncadd [#allocation6], 0
      %s33 = sshll.u32 %s1, 4
      %s34 = int_to_ptr.hbm [resolvable:$true] %s33
      %s35 = sshll.u32 [#allocation5], 4
      %s36 = int_to_ptr.vmem [resolvable:$true] %s35
      %41 = dma.hbm_to_vmem [thread:$0]  %s34, 2048, %s36, [#allocation6], 64, 64, 4
    $region9: #{tpu_custom_call.1} parent=1 // pred_fallthru
      _
    // Predicated region
    $region10: #{tpu_custom_call.1} parent=1 // pred_check
      _
    $region11: #{tpu_custom_call.1} parent=1 // pred_check_branch
      %43 = sbr.rel (0) target = $region13
    $region12: #{tpu_custom_call.1} parent=1 // pred_region
      _
    $region13: #{tpu_custom_call.1} parent=1 // pred_fallthru
      _
    // Predicated region
    $region14: #{tpu_custom_call.1} parent=1 // pred_check
      _
    $region15: #{tpu_custom_call.1} parent=1 // pred_check_branch
      %45 = sbr.rel (0) target = $region17
    $region16: #{tpu_custom_call.1} parent=1 // pred_region
      %47 = vsyncadd [#allocation6], 0
      %s48 = sshll.u32 %s3, 4
      %s49 = int_to_ptr.hbm [resolvable:$true] %s48
      %s50 = sshll.u32 [#allocation7], 4
      %s51 = int_to_ptr.vmem [resolvable:$true] %s50
      %56 = dma.hbm_to_vmem [thread:$0]  %s49, 2048, %s51, [#allocation6], 64, 64, 4
    $region17: #{tpu_custom_call.1} parent=1 // pred_fallthru
      _
    // Predicated region
    $region18: #{tpu_custom_call.1} parent=1 // pred_check
      _
    $region19: #{tpu_custom_call.1} parent=1 // pred_check_branch
      %58 = sbr.rel (0) target = $region21
    $region20: #{tpu_custom_call.1} parent=1 // pred_region
      _
    $region21: #{tpu_custom_call.1} parent=1 // pred_fallthru
      _
    // Predicated region
    $region22: #{tpu_custom_call.1} parent=1 // pred_check
      _
    $region23: #{tpu_custom_call.1} parent=1 // pred_check_branch
      %60 = sbr.rel (0) target = $region25
    $region24: #{tpu_custom_call.1} parent=1 // pred_region
      %62 = vsyncadd [#allocation9], 0
      %s63 = sshll.u32 %s5, 4
      %s64 = int_to_ptr.hbm [resolvable:$true] %s63
      %s65 = sshll.u32 [#allocation8], 4
      %s66 = int_to_ptr.vmem [resolvable:$true] %s65
      %71 = dma.hbm_to_vmem [thread:$0]  %s64, 1024, %s66, [#allocation9], 64, 64, 4
    $region25: #{tpu_custom_call.1} parent=1 // pred_fallthru
      _
    // Predicated region
    $region26: #{tpu_custom_call.1} parent=1 // pred_check
      _
    $region27: #{tpu_custom_call.1} parent=1 // pred_check_branch
      %73 = sbr.rel (0) target = $region29
    $region28: #{tpu_custom_call.1} parent=1 // pred_region
      _
    $region29: #{tpu_custom_call.1} parent=1 // pred_fallthru
      _
    // Predicated region
    $region30: #{tpu_custom_call.1} parent=1 // pred_check
      _
    $region31: #{tpu_custom_call.1} parent=1 // pred_check_branch
      %75 = sbr.rel (0) target = $region33
    $region32: #{tpu_custom_call.1} parent=1 // pred_region
      %77 = dma.done [#allocation3], 16384
    $region33: #{tpu_custom_call.1} parent=1 // pred_fallthru
      _
    // Predicated region
    $region34: #{tpu_custom_call.1} parent=1 // pred_check
      _
    $region35: #{tpu_custom_call.1} parent=1 // pred_check_branch
      %79 = sbr.rel (0) target = $region37
    $region36: #{tpu_custom_call.1} parent=1 // pred_region
      %81 = dma.done [#allocation6], 2048
    $region37: #{tpu_custom_call.1} parent=1 // pred_fallthru
      _
    // Predicated region
    $region38: #{tpu_custom_call.1} parent=1 // pred_check
      _
    $region39: #{tpu_custom_call.1} parent=1 // pred_check_branch
      %83 = sbr.rel (0) target = $region41
    $region40: #{tpu_custom_call.1} parent=1 // pred_region
      %85 = dma.done [#allocation6], 2048
    $region41: #{tpu_custom_call.1} parent=1 // pred_fallthru
      _
    // Predicated region
    $region42: #{tpu_custom_call.1} parent=1 // pred_check
      _
    $region43: #{tpu_custom_call.1} parent=1 // pred_check_branch
      %87 = sbr.rel (0) target = $region45
    $region44: #{tpu_custom_call.1} parent=1 // pred_region
      %89 = dma.done [#allocation9], 1024
    $region45: #{tpu_custom_call.1} parent=1 // pred_fallthru
      _
    %v90 = vld [vmem:[#allocation2] sm:$0xff]
    %v91 = vld [vmem:[#allocation2 + $0x8] sm:$0xff]
    %v92 = vld [vmem:[#allocation2 + $0x10] sm:$0xff]
    %v93 = vld [vmem:[#allocation2 + $0x18] sm:$0xff]
    %v94 = vld [vmem:[#allocation2 + $0x20] sm:$0xff]
    %v95 = vld [vmem:[#allocation2 + $0x28] sm:$0xff]
    %v96 = vld [vmem:[#allocation2 + $0x30] sm:$0xff]
    %v97 = vld [vmem:[#allocation2 + $0x38] sm:$0xff]
    %v98 = vld [vmem:[#allocation2 + $0x40] sm:$0xff]
    %v99 = vld [vmem:[#allocation2 + $0x48] sm:$0xff]
    %v100 = vld [vmem:[#allocation2 + $0x50] sm:$0xff]
    %v101 = vld [vmem:[#allocation2 + $0x58] sm:$0xff]
    %v102 = vld [vmem:[#allocation2 + $0x60] sm:$0xff]
    %v103 = vld [vmem:[#allocation2 + $0x68] sm:$0xff]
    %v104 = vld [vmem:[#allocation2 + $0x70] sm:$0xff]
    %v105 = vld [vmem:[#allocation2 + $0x78] sm:$0xff]
    %v106 = vld [vmem:[#allocation2 + $0x80] sm:$0xff]
    %v107 = vld [vmem:[#allocation2 + $0x88] sm:$0xff]
    %v108 = vld [vmem:[#allocation2 + $0x90] sm:$0xff]
    %v109 = vld [vmem:[#allocation2 + $0x98] sm:$0xff]
    %v110 = vld [vmem:[#allocation2 + $0xa0] sm:$0xff]
    %v111 = vld [vmem:[#allocation2 + $0xa8] sm:$0xff]
    %v112 = vld [vmem:[#allocation2 + $0xb0] sm:$0xff]
    %v113 = vld [vmem:[#allocation2 + $0xb8] sm:$0xff]
    %v114 = vld [vmem:[#allocation2 + $0xc0] sm:$0xff]
    %v115 = vld [vmem:[#allocation2 + $0xc8] sm:$0xff]
    %v116 = vld [vmem:[#allocation2 + $0xd0] sm:$0xff]
    %v117 = vld [vmem:[#allocation2 + $0xd8] sm:$0xff]
    %v118 = vld [vmem:[#allocation2 + $0xe0] sm:$0xff]
    %v119 = vld [vmem:[#allocation2 + $0xe8] sm:$0xff]
    %v120 = vld [vmem:[#allocation2 + $0xf0] sm:$0xff]
    %v121 = vld [vmem:[#allocation2 + $0xf8] sm:$0xff]
    %v122 = vld [vmem:[#allocation2 + $0x100] sm:$0xff]
    %v123 = vld [vmem:[#allocation2 + $0x108] sm:$0xff]
    %v124 = vld [vmem:[#allocation2 + $0x110] sm:$0xff]
    %v125 = vld [vmem:[#allocation2 + $0x118] sm:$0xff]
    %v126 = vld [vmem:[#allocation2 + $0x120] sm:$0xff]
    %v127 = vld [vmem:[#allocation2 + $0x128] sm:$0xff]
    %v128 = vld [vmem:[#allocation2 + $0x130] sm:$0xff]
    %v129 = vld [vmem:[#allocation2 + $0x138] sm:$0xff]
    %v130 = vld [vmem:[#allocation2 + $0x140] sm:$0xff]
    %v131 = vld [vmem:[#allocation2 + $0x148] sm:$0xff]
    %v132 = vld [vmem:[#allocation2 + $0x150] sm:$0xff]
    %v133 = vld [vmem:[#allocation2 + $0x158] sm:$0xff]
    %v134 = vld [vmem:[#allocation2 + $0x160] sm:$0xff]
    %v135 = vld [vmem:[#allocation2 + $0x168] sm:$0xff]
    %v136 = vld [vmem:[#allocation2 + $0x170] sm:$0xff]
    %v137 = vld [vmem:[#allocation2 + $0x178] sm:$0xff]
    %v138 = vld [vmem:[#allocation2 + $0x180] sm:$0xff]
    %v139 = vld [vmem:[#allocation2 + $0x188] sm:$0xff]
    %v140 = vld [vmem:[#allocation2 + $0x190] sm:$0xff]
    %v141 = vld [vmem:[#allocation2 + $0x198] sm:$0xff]
    %v142 = vld [vmem:[#allocation2 + $0x1a0] sm:$0xff]
    %v143 = vld [vmem:[#allocation2 + $0x1a8] sm:$0xff]
    %v144 = vld [vmem:[#allocation2 + $0x1b0] sm:$0xff]
    %v145 = vld [vmem:[#allocation2 + $0x1b8] sm:$0xff]
    %v146 = vld [vmem:[#allocation2 + $0x1c0] sm:$0xff]
    %v147 = vld [vmem:[#allocation2 + $0x1c8] sm:$0xff]
    %v148 = vld [vmem:[#allocation2 + $0x1d0] sm:$0xff]
    %v149 = vld [vmem:[#allocation2 + $0x1d8] sm:$0xff]
    %v150 = vld [vmem:[#allocation2 + $0x1e0] sm:$0xff]
    %v151 = vld [vmem:[#allocation2 + $0x1e8] sm:$0xff]
    %v152 = vld [vmem:[#allocation2 + $0x1f0] sm:$0xff]
    %v153 = vld [vmem:[#allocation2 + $0x1f8] sm:$0xff]
    %v154 = vld [vmem:[#allocation2 + $0x200] sm:$0xff]
    %v155 = vld [vmem:[#allocation2 + $0x208] sm:$0xff]
    %v156 = vld [vmem:[#allocation2 + $0x210] sm:$0xff]
    %v157 = vld [vmem:[#allocation2 + $0x218] sm:$0xff]
    %v158 = vld [vmem:[#allocation2 + $0x220] sm:$0xff]
    %v159 = vld [vmem:[#allocation2 + $0x228] sm:$0xff]
    %v160 = vld [vmem:[#allocation2 + $0x230] sm:$0xff]
    %v161 = vld [vmem:[#allocation2 + $0x238] sm:$0xff]
    %v162 = vld [vmem:[#allocation2 + $0x240] sm:$0xff]
    %v163 = vld [vmem:[#allocation2 + $0x248] sm:$0xff]
    %v164 = vld [vmem:[#allocation2 + $0x250] sm:$0xff]
    %v165 = vld [vmem:[#allocation2 + $0x258] sm:$0xff]
    %v166 = vld [vmem:[#allocation2 + $0x260] sm:$0xff]
    %v167 = vld [vmem:[#allocation2 + $0x268] sm:$0xff]
    %v168 = vld [vmem:[#allocation2 + $0x270] sm:$0xff]
    %v169 = vld [vmem:[#allocation2 + $0x278] sm:$0xff]
    %v170 = vld [vmem:[#allocation2 + $0x280] sm:$0xff]
    %v171 = vld [vmem:[#allocation2 + $0x288] sm:$0xff]
    %v172 = vld [vmem:[#allocation2 + $0x290] sm:$0xff]
    %v173 = vld [vmem:[#allocation2 + $0x298] sm:$0xff]
    %v174 = vld [vmem:[#allocation2 + $0x2a0] sm:$0xff]
    %v175 = vld [vmem:[#allocation2 + $0x2a8] sm:$0xff]
    %v176 = vld [vmem:[#allocation2 + $0x2b0] sm:$0xff]
    %v177 = vld [vmem:[#allocation2 + $0x2b8] sm:$0xff]
    %v178 = vld [vmem:[#allocation2 + $0x2c0] sm:$0xff]
    %v179 = vld [vmem:[#allocation2 + $0x2c8] sm:$0xff]
    %v180 = vld [vmem:[#allocation2 + $0x2d0] sm:$0xff]
    %v181 = vld [vmem:[#allocation2 + $0x2d8] sm:$0xff]
    %v182 = vld [vmem:[#allocation2 + $0x2e0] sm:$0xff]
    %v183 = vld [vmem:[#allocation2 + $0x2e8] sm:$0xff]
    %v184 = vld [vmem:[#allocation2 + $0x2f0] sm:$0xff]
    %v185 = vld [vmem:[#allocation2 + $0x2f8] sm:$0xff]
    %v186 = vld [vmem:[#allocation2 + $0x300] sm:$0xff]
    %v187 = vld [vmem:[#allocation2 + $0x308] sm:$0xff]
    %v188 = vld [vmem:[#allocation2 + $0x310] sm:$0xff]
    %v189 = vld [vmem:[#allocation2 + $0x318] sm:$0xff]
    %v190 = vld [vmem:[#allocation2 + $0x320] sm:$0xff]
    %v191 = vld [vmem:[#allocation2 + $0x328] sm:$0xff]
    %v192 = vld [vmem:[#allocation2 + $0x330] sm:$0xff]
    %v193 = vld [vmem:[#allocation2 + $0x338] sm:$0xff]
    %v194 = vld [vmem:[#allocation2 + $0x340] sm:$0xff]
    %v195 = vld [vmem:[#allocation2 + $0x348] sm:$0xff]
    %v196 = vld [vmem:[#allocation2 + $0x350] sm:$0xff]
    %v197 = vld [vmem:[#allocation2 + $0x358] sm:$0xff]
    %v198 = vld [vmem:[#allocation2 + $0x360] sm:$0xff]
    %v199 = vld [vmem:[#allocation2 + $0x368] sm:$0xff]
    %v200 = vld [vmem:[#allocation2 + $0x370] sm:$0xff]
    %v201 = vld [vmem:[#allocation2 + $0x378] sm:$0xff]
    %v202 = vld [vmem:[#allocation2 + $0x380] sm:$0xff]
    %v203 = vld [vmem:[#allocation2 + $0x388] sm:$0xff]
    %v204 = vld [vmem:[#allocation2 + $0x390] sm:$0xff]
    %v205 = vld [vmem:[#allocation2 + $0x398] sm:$0xff]
    %v206 = vld [vmem:[#allocation2 + $0x3a0] sm:$0xff]
    %v207 = vld [vmem:[#allocation2 + $0x3a8] sm:$0xff]
    %v208 = vld [vmem:[#allocation2 + $0x3b0] sm:$0xff]
    %v209 = vld [vmem:[#allocation2 + $0x3b8] sm:$0xff]
    %v210 = vld [vmem:[#allocation2 + $0x3c0] sm:$0xff]
    %v211 = vld [vmem:[#allocation2 + $0x3c8] sm:$0xff]
    %v212 = vld [vmem:[#allocation2 + $0x3d0] sm:$0xff]
    %v213 = vld [vmem:[#allocation2 + $0x3d8] sm:$0xff]
    %v214 = vld [vmem:[#allocation2 + $0x3e0] sm:$0xff]
    %v215 = vld [vmem:[#allocation2 + $0x3e8] sm:$0xff]
    %v216 = vld [vmem:[#allocation2 + $0x3f0] sm:$0xff]
    %v217 = vld [vmem:[#allocation2 + $0x3f8] sm:$0xff]
    %v218 = vpack.c.bf16 %v92, %v90
    %v219 = vpack.c.bf16 %v93, %v91
    %v220 = vpack.c.bf16 %v96, %v94
    %v221 = vpack.c.bf16 %v97, %v95
    %v222 = vpack.c.bf16 %v100, %v98
    %v223 = vpack.c.bf16 %v101, %v99
    %v224 = vpack.c.bf16 %v104, %v102
    %v225 = vpack.c.bf16 %v105, %v103
    %v226 = vpack.c.bf16 %v108, %v106
    %v227 = vpack.c.bf16 %v109, %v107
    %v228 = vpack.c.bf16 %v112, %v110
    %v229 = vpack.c.bf16 %v113, %v111
    %v230 = vpack.c.bf16 %v116, %v114
    %v231 = vpack.c.bf16 %v117, %v115
    %v232 = vpack.c.bf16 %v120, %v118
    %v233 = vpack.c.bf16 %v121, %v119
    %v234 = vpack.c.bf16 %v124, %v122
    %v235 = vpack.c.bf16 %v125, %v123
    %v236 = vpack.c.bf16 %v128, %v126
    %v237 = vpack.c.bf16 %v129, %v127
    %v238 = vpack.c.bf16 %v132, %v130
    %v239 = vpack.c.bf16 %v133, %v131
    %v240 = vpack.c.bf16 %v136, %v134
    %v241 = vpack.c.bf16 %v137, %v135
    %v242 = vpack.c.bf16 %v140, %v138
    %v243 = vpack.c.bf16 %v141, %v139
    %v244 = vpack.c.bf16 %v144, %v142
    %v245 = vpack.c.bf16 %v145, %v143
    %v246 = vpack.c.bf16 %v148, %v146
    %v247 = vpack.c.bf16 %v149, %v147
    %v248 = vpack.c.bf16 %v152, %v150
    %v249 = vpack.c.bf16 %v153, %v151
    %v250 = vpack.c.bf16 %v156, %v154
    %v251 = vpack.c.bf16 %v157, %v155
    %v252 = vpack.c.bf16 %v160, %v158
    %v253 = vpack.c.bf16 %v161, %v159
    %v254 = vpack.c.bf16 %v164, %v162
    %v255 = vpack.c.bf16 %v165, %v163
    %v256 = vpack.c.bf16 %v168, %v166
    %v257 = vpack.c.bf16 %v169, %v167
    %v258 = vpack.c.bf16 %v172, %v170
    %v259 = vpack.c.bf16 %v173, %v171
    %v260 = vpack.c.bf16 %v176, %v174
    %v261 = vpack.c.bf16 %v177, %v175
    %v262 = vpack.c.bf16 %v180, %v178
    %v263 = vpack.c.bf16 %v181, %v179
    %v264 = vpack.c.bf16 %v184, %v182
    %v265 = vpack.c.bf16 %v185, %v183
    %v266 = vpack.c.bf16 %v188, %v186
    %v267 = vpack.c.bf16 %v189, %v187
    %v268 = vpack.c.bf16 %v192, %v190
    %v269 = vpack.c.bf16 %v193, %v191
    %v270 = vpack.c.bf16 %v196, %v194
    %v271 = vpack.c.bf16 %v197, %v195
    %v272 = vpack.c.bf16 %v200, %v198
    %v273 = vpack.c.bf16 %v201, %v199
    %v274 = vpack.c.bf16 %v204, %v202
    %v275 = vpack.c.bf16 %v205, %v203
    %v276 = vpack.c.bf16 %v208, %v206
    %v277 = vpack.c.bf16 %v209, %v207
    %v278 = vpack.c.bf16 %v212, %v210
    %v279 = vpack.c.bf16 %v213, %v211
    %v280 = vpack.c.bf16 %v216, %v214
    %v281 = vpack.c.bf16 %v217, %v215
    %v282 = vld [vmem:[#allocation5] sm:$0xf]
    %v283 = vld [vmem:[#allocation5 + $0x4] sm:$0xf]
    %v284 = vld [vmem:[#allocation5 + $0x8] sm:$0xf]
    %v285 = vld [vmem:[#allocation5 + $0xc] sm:$0xf]
    %v286 = vld [vmem:[#allocation5 + $0x10] sm:$0xf]
    %v287 = vld [vmem:[#allocation5 + $0x14] sm:$0xf]
    %v288 = vld [vmem:[#allocation5 + $0x18] sm:$0xf]
    %v289 = vld [vmem:[#allocation5 + $0x1c] sm:$0xf]
    %v290 = vld [vmem:[#allocation5 + $0x20] sm:$0xf]
    %v291 = vld [vmem:[#allocation5 + $0x24] sm:$0xf]
    %v292 = vld [vmem:[#allocation5 + $0x28] sm:$0xf]
    %v293 = vld [vmem:[#allocation5 + $0x2c] sm:$0xf]
    %v294 = vld [vmem:[#allocation5 + $0x30] sm:$0xf]
    %v295 = vld [vmem:[#allocation5 + $0x34] sm:$0xf]
    %v296 = vld [vmem:[#allocation5 + $0x38] sm:$0xf]
    %v297 = vld [vmem:[#allocation5 + $0x3c] sm:$0xf]
    %v298 = vld [vmem:[#allocation5 + $0x40] sm:$0xf]
    %v299 = vld [vmem:[#allocation5 + $0x44] sm:$0xf]
    %v300 = vld [vmem:[#allocation5 + $0x48] sm:$0xf]
    %v301 = vld [vmem:[#allocation5 + $0x4c] sm:$0xf]
    %v302 = vld [vmem:[#allocation5 + $0x50] sm:$0xf]
    %v303 = vld [vmem:[#allocation5 + $0x54] sm:$0xf]
    %v304 = vld [vmem:[#allocation5 + $0x58] sm:$0xf]
    %v305 = vld [vmem:[#allocation5 + $0x5c] sm:$0xf]
    %v306 = vld [vmem:[#allocation5 + $0x60] sm:$0xf]
    %v307 = vld [vmem:[#allocation5 + $0x64] sm:$0xf]
    %v308 = vld [vmem:[#allocation5 + $0x68] sm:$0xf]
    %v309 = vld [vmem:[#allocation5 + $0x6c] sm:$0xf]
    %v310 = vld [vmem:[#allocation5 + $0x70] sm:$0xf]
    %v311 = vld [vmem:[#allocation5 + $0x74] sm:$0xf]
    %v312 = vld [vmem:[#allocation5 + $0x78] sm:$0xf]
    %v313 = vld [vmem:[#allocation5 + $0x7c] sm:$0xf]
    %v314 = vld [vmem:[%s2] sm:$0x1]
    %v316 = vperm.slane %v314, 0
    %v350 = vunpack.c.l.b16 %v282
    %v351 = vunpack.c.l.b16 %v283
    %v352 = vunpack.c.l.b16 %v284
    %v353 = vunpack.c.l.b16 %v285
    %v354 = vunpack.c.l.b16 %v286
    %v355 = vunpack.c.l.b16 %v287
    %v356 = vunpack.c.l.b16 %v288
    %v357 = vunpack.c.l.b16 %v289
    %v358 = vunpack.c.l.b16 %v290
    %v359 = vunpack.c.l.b16 %v291
    %v360 = vunpack.c.l.b16 %v292
    %v361 = vunpack.c.l.b16 %v293
    %v362 = vunpack.c.l.b16 %v294
    %v363 = vunpack.c.l.b16 %v295
    %v364 = vunpack.c.l.b16 %v296
    %v365 = vunpack.c.l.b16 %v297
    %v366 = vunpack.c.l.b16 %v298
    %v367 = vunpack.c.l.b16 %v299
    %v368 = vunpack.c.l.b16 %v300
    %v369 = vunpack.c.l.b16 %v301
    %v370 = vunpack.c.l.b16 %v302
    %v371 = vunpack.c.l.b16 %v303
    %v372 = vunpack.c.l.b16 %v304
    %v373 = vunpack.c.l.b16 %v305
    %v374 = vunpack.c.l.b16 %v306
    %v375 = vunpack.c.l.b16 %v307
    %v376 = vunpack.c.l.b16 %v308
    %v377 = vunpack.c.l.b16 %v309
    %v378 = vunpack.c.l.b16 %v310
    %v379 = vunpack.c.l.b16 %v311
    %v380 = vunpack.c.l.b16 %v312
    %v381 = vunpack.c.l.b16 %v313
    %v382 = vpack.c.b16 %v351, %v350
    %v383 = vpack.c.b16 %v353, %v352
    %v384 = vpack.c.b16 %v355, %v354
    %v385 = vpack.c.b16 %v357, %v356
    %v386 = vpack.c.b16 %v359, %v358
    %v387 = vpack.c.b16 %v361, %v360
    %v388 = vpack.c.b16 %v363, %v362
    %v389 = vpack.c.b16 %v365, %v364
    %v390 = vpack.c.b16 %v367, %v366
    %v391 = vpack.c.b16 %v369, %v368
    %v392 = vpack.c.b16 %v371, %v370
    %v393 = vpack.c.b16 %v373, %v372
    %v394 = vpack.c.b16 %v375, %v374
    %v395 = vpack.c.b16 %v377, %v376
    %v396 = vpack.c.b16 %v379, %v378
    %v397 = vpack.c.b16 %v381, %v380
    %414 = vmatpush.bf16.msra.mxu0 %v389
    %415 = vmatpush.bf16.msra.mxu0 %v388
    %416 = vmatpush.bf16.msra.mxu0 %v387
    %417 = vmatpush.bf16.msra.mxu0 %v386
    %418 = vmatpush.bf16.msra.mxu0 %v385
    %419 = vmatpush.bf16.msra.mxu0 %v384
    %420 = vmatpush.bf16.msra.mxu0 %v383
    %421 = vmatpush.bf16.msra.mxu0 %v382
    %422 = vmatmul.bf16.gmra.mxu0 %v218
    %v423 = vpop.f32.mrf.mxu0
    %v424 = vadd.f32 %v316, %v423
    %v425 = vpop.f32.mrf.mxu0
    %v426 = vadd.f32 %v316, %v425
    %427 = vmatmul.bf16.gmra.mxu0 %v220
    %v428 = vpop.f32.mrf.mxu0
    %v429 = vadd.f32 %v316, %v428
    %v430 = vpop.f32.mrf.mxu0
    %v431 = vadd.f32 %v316, %v430
    %432 = vmatmul.bf16.gmra.mxu0 %v222
    %v433 = vpop.f32.mrf.mxu0
    %v434 = vadd.f32 %v316, %v433
    %v435 = vpop.f32.mrf.mxu0
    %v436 = vadd.f32 %v316, %v435
    %437 = vmatmul.bf16.gmra.mxu0 %v224
    %v438 = vpop.f32.mrf.mxu0
    %v439 = vadd.f32 %v316, %v438
    %v440 = vpop.f32.mrf.mxu0
    %v441 = vadd.f32 %v316, %v440
    %442 = vmatmul.bf16.gmra.mxu0 %v226
    %v443 = vpop.f32.mrf.mxu0
    %v444 = vadd.f32 %v316, %v443
    %v445 = vpop.f32.mrf.mxu0
    %v446 = vadd.f32 %v316, %v445
    %447 = vmatmul.bf16.gmra.mxu0 %v228
    %v448 = vpop.f32.mrf.mxu0
    %v449 = vadd.f32 %v316, %v448
    %v450 = vpop.f32.mrf.mxu0
    %v451 = vadd.f32 %v316, %v450
    %452 = vmatmul.bf16.gmra.mxu0 %v230
    %v453 = vpop.f32.mrf.mxu0
    %v454 = vadd.f32 %v316, %v453
    %v455 = vpop.f32.mrf.mxu0
    %v456 = vadd.f32 %v316, %v455
    %457 = vmatmul.bf16.gmra.mxu0 %v232
    %v458 = vpop.f32.mrf.mxu0
    %v459 = vadd.f32 %v316, %v458
    %v460 = vpop.f32.mrf.mxu0
    %v461 = vadd.f32 %v316, %v460
    %462 = vmatmul.bf16.gmra.mxu0 %v234
    %v463 = vpop.f32.mrf.mxu0
    %v464 = vadd.f32 %v316, %v463
    %v465 = vpop.f32.mrf.mxu0
    %v466 = vadd.f32 %v316, %v465
    %467 = vmatmul.bf16.gmra.mxu0 %v236
    %v468 = vpop.f32.mrf.mxu0
    %v469 = vadd.f32 %v316, %v468
    %v470 = vpop.f32.mrf.mxu0
    %v471 = vadd.f32 %v316, %v470
    %472 = vmatmul.bf16.gmra.mxu0 %v238
    %v473 = vpop.f32.mrf.mxu0
    %v474 = vadd.f32 %v316, %v473
    %v475 = vpop.f32.mrf.mxu0
    %v476 = vadd.f32 %v316, %v475
    %477 = vmatmul.bf16.gmra.mxu0 %v240
    %v478 = vpop.f32.mrf.mxu0
    %v479 = vadd.f32 %v316, %v478
    %v480 = vpop.f32.mrf.mxu0
    %v481 = vadd.f32 %v316, %v480
    %482 = vmatmul.bf16.gmra.mxu0 %v242
    %v483 = vpop.f32.mrf.mxu0
    %v484 = vadd.f32 %v316, %v483
    %v485 = vpop.f32.mrf.mxu0
    %v486 = vadd.f32 %v316, %v485
    %487 = vmatmul.bf16.gmra.mxu0 %v244
    %v488 = vpop.f32.mrf.mxu0
    %v489 = vadd.f32 %v316, %v488
    %v490 = vpop.f32.mrf.mxu0
    %v491 = vadd.f32 %v316, %v490
    %492 = vmatmul.bf16.gmra.mxu0 %v246
    %v493 = vpop.f32.mrf.mxu0
    %v494 = vadd.f32 %v316, %v493
    %v495 = vpop.f32.mrf.mxu0
    %v496 = vadd.f32 %v316, %v495
    %497 = vmatmul.bf16.gmra.mxu0 %v248
    %v498 = vpop.f32.mrf.mxu0
    %v499 = vadd.f32 %v316, %v498
    %v500 = vpop.f32.mrf.mxu0
    %v501 = vadd.f32 %v316, %v500
    %502 = vmatmul.bf16.gmra.mxu0 %v250
    %v503 = vpop.f32.mrf.mxu0
    %v504 = vadd.f32 %v316, %v503
    %v505 = vpop.f32.mrf.mxu0
    %v506 = vadd.f32 %v316, %v505
    %507 = vmatmul.bf16.gmra.mxu0 %v252
    %v508 = vpop.f32.mrf.mxu0
    %v509 = vadd.f32 %v316, %v508
    %v510 = vpop.f32.mrf.mxu0
    %v511 = vadd.f32 %v316, %v510
    %512 = vmatmul.bf16.gmra.mxu0 %v254
    %v513 = vpop.f32.mrf.mxu0
    %v514 = vadd.f32 %v316, %v513
    %v515 = vpop.f32.mrf.mxu0
    %v516 = vadd.f32 %v316, %v515
    %517 = vmatmul.bf16.gmra.mxu0 %v256
    %v518 = vpop.f32.mrf.mxu0
    %v519 = vadd.f32 %v316, %v518
    %v520 = vpop.f32.mrf.mxu0
    %v521 = vadd.f32 %v316, %v520
    %522 = vmatmul.bf16.gmra.mxu0 %v258
    %v523 = vpop.f32.mrf.mxu0
    %v524 = vadd.f32 %v316, %v523
    %v525 = vpop.f32.mrf.mxu0
    %v526 = vadd.f32 %v316, %v525
    %527 = vmatmul.bf16.gmra.mxu0 %v260
    %v528 = vpop.f32.mrf.mxu0
    %v529 = vadd.f32 %v316, %v528
    %v530 = vpop.f32.mrf.mxu0
    %v531 = vadd.f32 %v316, %v530
    %532 = vmatmul.bf16.gmra.mxu0 %v262
    %v533 = vpop.f32.mrf.mxu0
    %v534 = vadd.f32 %v316, %v533
    %v535 = vpop.f32.mrf.mxu0
    %v536 = vadd.f32 %v316, %v535
    %537 = vmatmul.bf16.gmra.mxu0 %v264
    %v538 = vpop.f32.mrf.mxu0
    %v539 = vadd.f32 %v316, %v538
    %v540 = vpop.f32.mrf.mxu0
    %v541 = vadd.f32 %v316, %v540
    %542 = vmatmul.bf16.gmra.mxu0 %v266
    %v543 = vpop.f32.mrf.mxu0
    %v544 = vadd.f32 %v316, %v543
    %v545 = vpop.f32.mrf.mxu0
    %v546 = vadd.f32 %v316, %v545
    %547 = vmatmul.bf16.gmra.mxu0 %v268
    %v548 = vpop.f32.mrf.mxu0
    %v549 = vadd.f32 %v316, %v548
    %v550 = vpop.f32.mrf.mxu0
    %v551 = vadd.f32 %v316, %v550
    %552 = vmatmul.bf16.gmra.mxu0 %v270
    %v553 = vpop.f32.mrf.mxu0
    %v554 = vadd.f32 %v316, %v553
    %v555 = vpop.f32.mrf.mxu0
    %v556 = vadd.f32 %v316, %v555
    %557 = vmatmul.bf16.gmra.mxu0 %v272
    %v558 = vpop.f32.mrf.mxu0
    %v559 = vadd.f32 %v316, %v558
    %v560 = vpop.f32.mrf.mxu0
    %v561 = vadd.f32 %v316, %v560
    %562 = vmatmul.bf16.gmra.mxu0 %v274
    %v563 = vpop.f32.mrf.mxu0
    %v564 = vadd.f32 %v316, %v563
    %v565 = vpop.f32.mrf.mxu0
    %v566 = vadd.f32 %v316, %v565
    %567 = vmatmul.bf16.gmra.mxu0 %v276
    %v568 = vpop.f32.mrf.mxu0
    %v569 = vadd.f32 %v316, %v568
    %v570 = vpop.f32.mrf.mxu0
    %v571 = vadd.f32 %v316, %v570
    %572 = vmatmul.bf16.gmra.mxu0 %v278
    %v573 = vpop.f32.mrf.mxu0
    %v574 = vadd.f32 %v316, %v573
    %v575 = vpop.f32.mrf.mxu0
    %v576 = vadd.f32 %v316, %v575
    %577 = vmatmul.bf16.gmra.mxu0 %v280
    %v578 = vpop.f32.mrf.mxu0
    %v579 = vadd.f32 %v316, %v578
    %v580 = vpop.f32.mrf.mxu0
    %v581 = vadd.f32 %v316, %v580
    %582 = vdwg.mxu0
    %583 = vmatpush.bf16.msra.mxu0 %v397
    %584 = vmatpush.bf16.msra.mxu0 %v396
    %585 = vmatpush.bf16.msra.mxu0 %v395
    %586 = vmatpush.bf16.msra.mxu0 %v394
    %587 = vmatpush.bf16.msra.mxu0 %v393
    %588 = vmatpush.bf16.msra.mxu0 %v392
    %589 = vmatpush.bf16.msra.mxu0 %v391
    %590 = vmatpush.bf16.msra.mxu0 %v390
    %591 = vmatmul.bf16.gmra.mxu0 %v219
    %v592 = vpop.f32.mrf.mxu0
    %v593 = vadd.f32 %v424, %v592
    %v594 = vpop.f32.mrf.mxu0
    %v595 = vadd.f32 %v426, %v594
    %596 = vmatmul.bf16.gmra.mxu0 %v221
    %v597 = vpop.f32.mrf.mxu0
    %v598 = vadd.f32 %v429, %v597
    %v599 = vpop.f32.mrf.mxu0
    %v600 = vadd.f32 %v431, %v599
    %601 = vmatmul.bf16.gmra.mxu0 %v223
    %v602 = vpop.f32.mrf.mxu0
    %v603 = vadd.f32 %v434, %v602
    %v604 = vpop.f32.mrf.mxu0
    %v605 = vadd.f32 %v436, %v604
    %606 = vmatmul.bf16.gmra.mxu0 %v225
    %v607 = vpop.f32.mrf.mxu0
    %v608 = vadd.f32 %v439, %v607
    %v609 = vpop.f32.mrf.mxu0
    %v610 = vadd.f32 %v441, %v609
    %611 = vmatmul.bf16.gmra.mxu0 %v227
    %v612 = vpop.f32.mrf.mxu0
    %v613 = vadd.f32 %v444, %v612
    %v614 = vpop.f32.mrf.mxu0
    %v615 = vadd.f32 %v446, %v614
    %616 = vmatmul.bf16.gmra.mxu0 %v229
    %v617 = vpop.f32.mrf.mxu0
    %v618 = vadd.f32 %v449, %v617
    %v619 = vpop.f32.mrf.mxu0
    %v620 = vadd.f32 %v451, %v619
    %621 = vmatmul.bf16.gmra.mxu0 %v231
    %v622 = vpop.f32.mrf.mxu0
    %v623 = vadd.f32 %v454, %v622
    %v624 = vpop.f32.mrf.mxu0
    %v625 = vadd.f32 %v456, %v624
    %626 = vmatmul.bf16.gmra.mxu0 %v233
    %v627 = vpop.f32.mrf.mxu0
    %v628 = vadd.f32 %v459, %v627
    %v629 = vpop.f32.mrf.mxu0
    %v630 = vadd.f32 %v461, %v629
    %631 = vmatmul.bf16.gmra.mxu0 %v235
    %v632 = vpop.f32.mrf.mxu0
    %v633 = vadd.f32 %v464, %v632
    %v634 = vpop.f32.mrf.mxu0
    %v635 = vadd.f32 %v466, %v634
    %636 = vmatmul.bf16.gmra.mxu0 %v237
    %v637 = vpop.f32.mrf.mxu0
    %v638 = vadd.f32 %v469, %v637
    %v639 = vpop.f32.mrf.mxu0
    %v640 = vadd.f32 %v471, %v639
    %641 = vmatmul.bf16.gmra.mxu0 %v239
    %v642 = vpop.f32.mrf.mxu0
    %v643 = vadd.f32 %v474, %v642
    %v644 = vpop.f32.mrf.mxu0
    %v645 = vadd.f32 %v476, %v644
    %646 = vmatmul.bf16.gmra.mxu0 %v241
    %v647 = vpop.f32.mrf.mxu0
    %v648 = vadd.f32 %v479, %v647
    %v649 = vpop.f32.mrf.mxu0
    %v650 = vadd.f32 %v481, %v649
    %651 = vmatmul.bf16.gmra.mxu0 %v243
    %v652 = vpop.f32.mrf.mxu0
    %v653 = vadd.f32 %v484, %v652
    %v654 = vpop.f32.mrf.mxu0
    %v655 = vadd.f32 %v486, %v654
    %656 = vmatmul.bf16.gmra.mxu0 %v245
    %v657 = vpop.f32.mrf.mxu0
    %v658 = vadd.f32 %v489, %v657
    %v659 = vpop.f32.mrf.mxu0
    %v660 = vadd.f32 %v491, %v659
    %661 = vmatmul.bf16.gmra.mxu0 %v247
    %v662 = vpop.f32.mrf.mxu0
    %v663 = vadd.f32 %v494, %v662
    %v664 = vpop.f32.mrf.mxu0
    %v665 = vadd.f32 %v496, %v664
    %666 = vmatmul.bf16.gmra.mxu0 %v249
    %v667 = vpop.f32.mrf.mxu0
    %v668 = vadd.f32 %v499, %v667
    %v669 = vpop.f32.mrf.mxu0
    %v670 = vadd.f32 %v501, %v669
    %671 = vmatmul.bf16.gmra.mxu0 %v251
    %v672 = vpop.f32.mrf.mxu0
    %v673 = vadd.f32 %v504, %v672
    %v674 = vpop.f32.mrf.mxu0
    %v675 = vadd.f32 %v506, %v674
    %676 = vmatmul.bf16.gmra.mxu0 %v253
    %v677 = vpop.f32.mrf.mxu0
    %v678 = vadd.f32 %v509, %v677
    %v679 = vpop.f32.mrf.mxu0
    %v680 = vadd.f32 %v511, %v679
    %681 = vmatmul.bf16.gmra.mxu0 %v255
    %v682 = vpop.f32.mrf.mxu0
    %v683 = vadd.f32 %v514, %v682
    %v684 = vpop.f32.mrf.mxu0
    %v685 = vadd.f32 %v516, %v684
    %686 = vmatmul.bf16.gmra.mxu0 %v257
    %v687 = vpop.f32.mrf.mxu0
    %v688 = vadd.f32 %v519, %v687
    %v689 = vpop.f32.mrf.mxu0
    %v690 = vadd.f32 %v521, %v689
    %691 = vmatmul.bf16.gmra.mxu0 %v259
    %v692 = vpop.f32.mrf.mxu0
    %v693 = vadd.f32 %v524, %v692
    %v694 = vpop.f32.mrf.mxu0
    %v695 = vadd.f32 %v526, %v694
    %696 = vmatmul.bf16.gmra.mxu0 %v261
    %v697 = vpop.f32.mrf.mxu0
    %v698 = vadd.f32 %v529, %v697
    %v699 = vpop.f32.mrf.mxu0
    %v700 = vadd.f32 %v531, %v699
    %701 = vmatmul.bf16.gmra.mxu0 %v263
    %v702 = vpop.f32.mrf.mxu0
    %v703 = vadd.f32 %v534, %v702
    %v704 = vpop.f32.mrf.mxu0
    %v705 = vadd.f32 %v536, %v704
    %706 = vmatmul.bf16.gmra.mxu0 %v265
    %v707 = vpop.f32.mrf.mxu0
    %v708 = vadd.f32 %v539, %v707
    %v709 = vpop.f32.mrf.mxu0
    %v710 = vadd.f32 %v541, %v709
    %711 = vmatmul.bf16.gmra.mxu0 %v267
    %v712 = vpop.f32.mrf.mxu0
    %v713 = vadd.f32 %v544, %v712
    %v714 = vpop.f32.mrf.mxu0
    %v715 = vadd.f32 %v546, %v714
    %716 = vmatmul.bf16.gmra.mxu0 %v269
    %v717 = vpop.f32.mrf.mxu0
    %v718 = vadd.f32 %v549, %v717
    %v719 = vpop.f32.mrf.mxu0
    %v720 = vadd.f32 %v551, %v719
    %721 = vmatmul.bf16.gmra.mxu0 %v271
    %v722 = vpop.f32.mrf.mxu0
    %v723 = vadd.f32 %v554, %v722
    %v724 = vpop.f32.mrf.mxu0
    %v725 = vadd.f32 %v556, %v724
    %726 = vmatmul.bf16.gmra.mxu0 %v273
    %v727 = vpop.f32.mrf.mxu0
    %v728 = vadd.f32 %v559, %v727
    %v729 = vpop.f32.mrf.mxu0
    %v730 = vadd.f32 %v561, %v729
    %731 = vmatmul.bf16.gmra.mxu0 %v275
    %v732 = vpop.f32.mrf.mxu0
    %v733 = vadd.f32 %v564, %v732
    %v734 = vpop.f32.mrf.mxu0
    %v735 = vadd.f32 %v566, %v734
    %736 = vmatmul.bf16.gmra.mxu0 %v277
    %v737 = vpop.f32.mrf.mxu0
    %v738 = vadd.f32 %v569, %v737
    %v739 = vpop.f32.mrf.mxu0
    %v740 = vadd.f32 %v571, %v739
    %741 = vmatmul.bf16.gmra.mxu0 %v279
    %v742 = vpop.f32.mrf.mxu0
    %v743 = vadd.f32 %v574, %v742
    %v744 = vpop.f32.mrf.mxu0
    %v745 = vadd.f32 %v576, %v744
    %746 = vmatmul.bf16.gmra.mxu0 %v281
    %v747 = vpop.f32.mrf.mxu0
    %v748 = vadd.f32 %v579, %v747
    %v749 = vpop.f32.mrf.mxu0
    %v750 = vadd.f32 %v581, %v749
    %751 = vdwg.mxu0
    %v752 = vpack.c.bf16 %v595, %v593
    %v753 = vpack.c.bf16 %v600, %v598
    %v754 = vpack.c.bf16 %v605, %v603
    %v755 = vpack.c.bf16 %v610, %v608
    %v756 = vpack.c.bf16 %v615, %v613
    %v757 = vpack.c.bf16 %v620, %v618
    %v758 = vpack.c.bf16 %v625, %v623
    %v759 = vpack.c.bf16 %v630, %v628
    %v760 = vpack.c.bf16 %v635, %v633
    %v761 = vpack.c.bf16 %v640, %v638
    %v762 = vpack.c.bf16 %v645, %v643
    %v763 = vpack.c.bf16 %v650, %v648
    %v764 = vpack.c.bf16 %v655, %v653
    %v765 = vpack.c.bf16 %v660, %v658
    %v766 = vpack.c.bf16 %v665, %v663
    %v767 = vpack.c.bf16 %v670, %v668
    %v768 = vpack.c.bf16 %v675, %v673
    %v769 = vpack.c.bf16 %v680, %v678
    %v770 = vpack.c.bf16 %v685, %v683
    %v771 = vpack.c.bf16 %v690, %v688
    %v772 = vpack.c.bf16 %v695, %v693
    %v773 = vpack.c.bf16 %v700, %v698
    %v774 = vpack.c.bf16 %v705, %v703
    %v775 = vpack.c.bf16 %v710, %v708
    %v776 = vpack.c.bf16 %v715, %v713
    %v777 = vpack.c.bf16 %v720, %v718
    %v778 = vpack.c.bf16 %v725, %v723
    %v779 = vpack.c.bf16 %v730, %v728
    %v780 = vpack.c.bf16 %v735, %v733
    %v781 = vpack.c.bf16 %v740, %v738
    %v782 = vpack.c.bf16 %v745, %v743
    %v783 = vpack.c.bf16 %v750, %v748
    %v784 = vld [vmem:[#allocation7] sm:$0xf]
    %v785 = vld [vmem:[#allocation7 + $0x4] sm:$0xf]
    %v786 = vld [vmem:[#allocation7 + $0x8] sm:$0xf]
    %v787 = vld [vmem:[#allocation7 + $0xc] sm:$0xf]
    %v788 = vld [vmem:[#allocation7 + $0x10] sm:$0xf]
    %v789 = vld [vmem:[#allocation7 + $0x14] sm:$0xf]
    %v790 = vld [vmem:[#allocation7 + $0x18] sm:$0xf]
    %v791 = vld [vmem:[#allocation7 + $0x1c] sm:$0xf]
    %v792 = vld [vmem:[#allocation7 + $0x20] sm:$0xf]
    %v793 = vld [vmem:[#allocation7 + $0x24] sm:$0xf]
    %v794 = vld [vmem:[#allocation7 + $0x28] sm:$0xf]
    %v795 = vld [vmem:[#allocation7 + $0x2c] sm:$0xf]
    %v796 = vld [vmem:[#allocation7 + $0x30] sm:$0xf]
    %v797 = vld [vmem:[#allocation7 + $0x34] sm:$0xf]
    %v798 = vld [vmem:[#allocation7 + $0x38] sm:$0xf]
    %v799 = vld [vmem:[#allocation7 + $0x3c] sm:$0xf]
    %v800 = vld [vmem:[%s4] sm:$0x1]
    %v802 = vperm.slane %v800, 0
    %v820 = vunpack.c.l.b16 %v784
    %v821 = vunpack.c.l.b16 %v785
    %v822 = vunpack.c.l.b16 %v786
    %v823 = vunpack.c.l.b16 %v787
    %v824 = vunpack.c.l.b16 %v788
    %v825 = vunpack.c.l.b16 %v789
    %v826 = vunpack.c.l.b16 %v790
    %v827 = vunpack.c.l.b16 %v791
    %v828 = vunpack.c.l.b16 %v792
    %v829 = vunpack.c.l.b16 %v793
    %v830 = vunpack.c.l.b16 %v794
    %v831 = vunpack.c.l.b16 %v795
    %v832 = vunpack.c.l.b16 %v796
    %v833 = vunpack.c.l.b16 %v797
    %v834 = vunpack.c.l.b16 %v798
    %v835 = vunpack.c.l.b16 %v799
    %v836 = vpack.c.b16 %v821, %v820
    %v837 = vpack.c.b16 %v823, %v822
    %v838 = vpack.c.b16 %v825, %v824
    %v839 = vpack.c.b16 %v827, %v826
    %v840 = vpack.c.b16 %v829, %v828
    %v841 = vpack.c.b16 %v831, %v830
    %v842 = vpack.c.b16 %v833, %v832
    %v843 = vpack.c.b16 %v835, %v834
    %852 = vmatpush.bf16.msra.mxu0 %v843
    %853 = vmatpush.bf16.msra.mxu0 %v842
    %854 = vmatpush.bf16.msra.mxu0 %v841
    %855 = vmatpush.bf16.msra.mxu0 %v840
    %856 = vmatpush.bf16.msra.mxu0 %v839
    %857 = vmatpush.bf16.msra.mxu0 %v838
    %858 = vmatpush.bf16.msra.mxu0 %v837
    %859 = vmatpush.bf16.msra.mxu0 %v836
    %860 = vmatmul.bf16.gmra.mxu0 %v752
    %v861 = vpop.f32.mrf.mxu0
    %v862 = vadd.f32 %v802, %v861
    %v863 = vpop.f32.mrf.mxu0
    %v864 = vadd.f32 %v802, %v863
    %865 = vmatmul.bf16.gmra.mxu0 %v753
    %v866 = vpop.f32.mrf.mxu0
    %v867 = vadd.f32 %v802, %v866
    %v868 = vpop.f32.mrf.mxu0
    %v869 = vadd.f32 %v802, %v868
    %870 = vmatmul.bf16.gmra.mxu0 %v754
    %v871 = vpop.f32.mrf.mxu0
    %v872 = vadd.f32 %v802, %v871
    %v873 = vpop.f32.mrf.mxu0
    %v874 = vadd.f32 %v802, %v873
    %875 = vmatmul.bf16.gmra.mxu0 %v755
    %v876 = vpop.f32.mrf.mxu0
    %v877 = vadd.f32 %v802, %v876
    %v878 = vpop.f32.mrf.mxu0
    %v879 = vadd.f32 %v802, %v878
    %880 = vmatmul.bf16.gmra.mxu0 %v756
    %v881 = vpop.f32.mrf.mxu0
    %v882 = vadd.f32 %v802, %v881
    %v883 = vpop.f32.mrf.mxu0
    %v884 = vadd.f32 %v802, %v883
    %885 = vmatmul.bf16.gmra.mxu0 %v757
    %v886 = vpop.f32.mrf.mxu0
    %v887 = vadd.f32 %v802, %v886
    %v888 = vpop.f32.mrf.mxu0
    %v889 = vadd.f32 %v802, %v888
    %890 = vmatmul.bf16.gmra.mxu0 %v758
    %v891 = vpop.f32.mrf.mxu0
    %v892 = vadd.f32 %v802, %v891
    %v893 = vpop.f32.mrf.mxu0
    %v894 = vadd.f32 %v802, %v893
    %895 = vmatmul.bf16.gmra.mxu0 %v759
    %v896 = vpop.f32.mrf.mxu0
    %v897 = vadd.f32 %v802, %v896
    %v898 = vpop.f32.mrf.mxu0
    %v899 = vadd.f32 %v802, %v898
    %900 = vmatmul.bf16.gmra.mxu0 %v760
    %v901 = vpop.f32.mrf.mxu0
    %v902 = vadd.f32 %v802, %v901
    %v903 = vpop.f32.mrf.mxu0
    %v904 = vadd.f32 %v802, %v903
    %905 = vmatmul.bf16.gmra.mxu0 %v761
    %v906 = vpop.f32.mrf.mxu0
    %v907 = vadd.f32 %v802, %v906
    %v908 = vpop.f32.mrf.mxu0
    %v909 = vadd.f32 %v802, %v908
    %910 = vmatmul.bf16.gmra.mxu0 %v762
    %v911 = vpop.f32.mrf.mxu0
    %v912 = vadd.f32 %v802, %v911
    %v913 = vpop.f32.mrf.mxu0
    %v914 = vadd.f32 %v802, %v913
    %915 = vmatmul.bf16.gmra.mxu0 %v763
    %v916 = vpop.f32.mrf.mxu0
    %v917 = vadd.f32 %v802, %v916
    %v918 = vpop.f32.mrf.mxu0
    %v919 = vadd.f32 %v802, %v918
    %920 = vmatmul.bf16.gmra.mxu0 %v764
    %v921 = vpop.f32.mrf.mxu0
    %v922 = vadd.f32 %v802, %v921
    %v923 = vpop.f32.mrf.mxu0
    %v924 = vadd.f32 %v802, %v923
    %925 = vmatmul.bf16.gmra.mxu0 %v765
    %v926 = vpop.f32.mrf.mxu0
    %v927 = vadd.f32 %v802, %v926
    %v928 = vpop.f32.mrf.mxu0
    %v929 = vadd.f32 %v802, %v928
    %930 = vmatmul.bf16.gmra.mxu0 %v766
    %v931 = vpop.f32.mrf.mxu0
    %v932 = vadd.f32 %v802, %v931
    %v933 = vpop.f32.mrf.mxu0
    %v934 = vadd.f32 %v802, %v933
    %935 = vmatmul.bf16.gmra.mxu0 %v767
    %v936 = vpop.f32.mrf.mxu0
    %v937 = vadd.f32 %v802, %v936
    %v938 = vpop.f32.mrf.mxu0
    %v939 = vadd.f32 %v802, %v938
    %940 = vmatmul.bf16.gmra.mxu0 %v768
    %v941 = vpop.f32.mrf.mxu0
    %v942 = vadd.f32 %v802, %v941
    %v943 = vpop.f32.mrf.mxu0
    %v944 = vadd.f32 %v802, %v943
    %945 = vmatmul.bf16.gmra.mxu0 %v769
    %v946 = vpop.f32.mrf.mxu0
    %v947 = vadd.f32 %v802, %v946
    %v948 = vpop.f32.mrf.mxu0
    %v949 = vadd.f32 %v802, %v948
    %950 = vmatmul.bf16.gmra.mxu0 %v770
    %v951 = vpop.f32.mrf.mxu0
    %v952 = vadd.f32 %v802, %v951
    %v953 = vpop.f32.mrf.mxu0
    %v954 = vadd.f32 %v802, %v953
    %955 = vmatmul.bf16.gmra.mxu0 %v771
    %v956 = vpop.f32.mrf.mxu0
    %v957 = vadd.f32 %v802, %v956
    %v958 = vpop.f32.mrf.mxu0
    %v959 = vadd.f32 %v802, %v958
    %960 = vmatmul.bf16.gmra.mxu0 %v772
    %v961 = vpop.f32.mrf.mxu0
    %v962 = vadd.f32 %v802, %v961
    %v963 = vpop.f32.mrf.mxu0
    %v964 = vadd.f32 %v802, %v963
    %965 = vmatmul.bf16.gmra.mxu0 %v773
    %v966 = vpop.f32.mrf.mxu0
    %v967 = vadd.f32 %v802, %v966
    %v968 = vpop.f32.mrf.mxu0
    %v969 = vadd.f32 %v802, %v968
    %970 = vmatmul.bf16.gmra.mxu0 %v774
    %v971 = vpop.f32.mrf.mxu0
    %v972 = vadd.f32 %v802, %v971
    %v973 = vpop.f32.mrf.mxu0
    %v974 = vadd.f32 %v802, %v973
    %975 = vmatmul.bf16.gmra.mxu0 %v775
    %v976 = vpop.f32.mrf.mxu0
    %v977 = vadd.f32 %v802, %v976
    %v978 = vpop.f32.mrf.mxu0
    %v979 = vadd.f32 %v802, %v978
    %980 = vmatmul.bf16.gmra.mxu0 %v776
    %v981 = vpop.f32.mrf.mxu0
    %v982 = vadd.f32 %v802, %v981
    %v983 = vpop.f32.mrf.mxu0
    %v984 = vadd.f32 %v802, %v983
    %985 = vmatmul.bf16.gmra.mxu0 %v777
    %v986 = vpop.f32.mrf.mxu0
    %v987 = vadd.f32 %v802, %v986
    %v988 = vpop.f32.mrf.mxu0
    %v989 = vadd.f32 %v802, %v988
    %990 = vmatmul.bf16.gmra.mxu0 %v778
    %v991 = vpop.f32.mrf.mxu0
    %v992 = vadd.f32 %v802, %v991
    %v993 = vpop.f32.mrf.mxu0
    %v994 = vadd.f32 %v802, %v993
    %995 = vmatmul.bf16.gmra.mxu0 %v779
    %v996 = vpop.f32.mrf.mxu0
    %v997 = vadd.f32 %v802, %v996
    %v998 = vpop.f32.mrf.mxu0
    %v999 = vadd.f32 %v802, %v998
    %1000 = vmatmul.bf16.gmra.mxu0 %v780
    %v1001 = vpop.f32.mrf.mxu0
    %v1002 = vadd.f32 %v802, %v1001
    %v1003 = vpop.f32.mrf.mxu0
    %v1004 = vadd.f32 %v802, %v1003
    %1005 = vmatmul.bf16.gmra.mxu0 %v781
    %v1006 = vpop.f32.mrf.mxu0
    %v1007 = vadd.f32 %v802, %v1006
    %v1008 = vpop.f32.mrf.mxu0
    %v1009 = vadd.f32 %v802, %v1008
    %1010 = vmatmul.bf16.gmra.mxu0 %v782
    %v1011 = vpop.f32.mrf.mxu0
    %v1012 = vadd.f32 %v802, %v1011
    %v1013 = vpop.f32.mrf.mxu0
    %v1014 = vadd.f32 %v802, %v1013
    %1015 = vmatmul.bf16.gmra.mxu0 %v783
    %v1016 = vpop.f32.mrf.mxu0
    %v1017 = vadd.f32 %v802, %v1016
    %v1018 = vpop.f32.mrf.mxu0
    %v1019 = vadd.f32 %v802, %v1018
    %1020 = vdwg.mxu0
    %v1021 = vmax.f32 %v862, 0.0
    %v1022 = vmax.f32 %v864, 0.0
    %v1023 = vmax.f32 %v867, 0.0
    %v1024 = vmax.f32 %v869, 0.0
    %v1025 = vmax.f32 %v872, 0.0
    %v1026 = vmax.f32 %v874, 0.0
    %v1027 = vmax.f32 %v877, 0.0
    %v1028 = vmax.f32 %v879, 0.0
    %v1029 = vmax.f32 %v882, 0.0
    %v1030 = vmax.f32 %v884, 0.0
    %v1031 = vmax.f32 %v887, 0.0
    %v1032 = vmax.f32 %v889, 0.0
    %v1033 = vmax.f32 %v892, 0.0
    %v1034 = vmax.f32 %v894, 0.0
    %v1035 = vmax.f32 %v897, 0.0
    %v1036 = vmax.f32 %v899, 0.0
    %v1037 = vmax.f32 %v902, 0.0
    %v1038 = vmax.f32 %v904, 0.0
    %v1039 = vmax.f32 %v907, 0.0
    %v1040 = vmax.f32 %v909, 0.0
    %v1041 = vmax.f32 %v912, 0.0
    %v1042 = vmax.f32 %v914, 0.0
    %v1043 = vmax.f32 %v917, 0.0
    %v1044 = vmax.f32 %v919, 0.0
    %v1045 = vmax.f32 %v922, 0.0
    %v1046 = vmax.f32 %v924, 0.0
    %v1047 = vmax.f32 %v927, 0.0
    %v1048 = vmax.f32 %v929, 0.0
    %v1049 = vmax.f32 %v932, 0.0
    %v1050 = vmax.f32 %v934, 0.0
    %v1051 = vmax.f32 %v937, 0.0
    %v1052 = vmax.f32 %v939, 0.0
    %v1053 = vmax.f32 %v942, 0.0
    %v1054 = vmax.f32 %v944, 0.0
    %v1055 = vmax.f32 %v947, 0.0
    %v1056 = vmax.f32 %v949, 0.0
    %v1057 = vmax.f32 %v952, 0.0
    %v1058 = vmax.f32 %v954, 0.0
    %v1059 = vmax.f32 %v957, 0.0
    %v1060 = vmax.f32 %v959, 0.0
    %v1061 = vmax.f32 %v962, 0.0
    %v1062 = vmax.f32 %v964, 0.0
    %v1063 = vmax.f32 %v967, 0.0
    %v1064 = vmax.f32 %v969, 0.0
    %v1065 = vmax.f32 %v972, 0.0
    %v1066 = vmax.f32 %v974, 0.0
    %v1067 = vmax.f32 %v977, 0.0
    %v1068 = vmax.f32 %v979, 0.0
    %v1069 = vmax.f32 %v982, 0.0
    %v1070 = vmax.f32 %v984, 0.0
    %v1071 = vmax.f32 %v987, 0.0
    %v1072 = vmax.f32 %v989, 0.0
    %v1073 = vmax.f32 %v992, 0.0
    %v1074 = vmax.f32 %v994, 0.0
    %v1075 = vmax.f32 %v997, 0.0
    %v1076 = vmax.f32 %v999, 0.0
    %v1077 = vmax.f32 %v1002, 0.0
    %v1078 = vmax.f32 %v1004, 0.0
    %v1079 = vmax.f32 %v1007, 0.0
    %v1080 = vmax.f32 %v1009, 0.0
    %v1081 = vmax.f32 %v1012, 0.0
    %v1082 = vmax.f32 %v1014, 0.0
    %v1083 = vmax.f32 %v1017, 0.0
    %v1084 = vmax.f32 %v1019, 0.0
    %v1085 = vpack.c.bf16 %v1022, %v1021
    %v1086 = vpack.c.bf16 %v1024, %v1023
    %v1087 = vpack.c.bf16 %v1026, %v1025
    %v1088 = vpack.c.bf16 %v1028, %v1027
    %v1089 = vpack.c.bf16 %v1030, %v1029
    %v1090 = vpack.c.bf16 %v1032, %v1031
    %v1091 = vpack.c.bf16 %v1034, %v1033
    %v1092 = vpack.c.bf16 %v1036, %v1035
    %v1093 = vpack.c.bf16 %v1038, %v1037
    %v1094 = vpack.c.bf16 %v1040, %v1039
    %v1095 = vpack.c.bf16 %v1042, %v1041
    %v1096 = vpack.c.bf16 %v1044, %v1043
    %v1097 = vpack.c.bf16 %v1046, %v1045
    %v1098 = vpack.c.bf16 %v1048, %v1047
    %v1099 = vpack.c.bf16 %v1050, %v1049
    %v1100 = vpack.c.bf16 %v1052, %v1051
    %v1101 = vpack.c.bf16 %v1054, %v1053
    %v1102 = vpack.c.bf16 %v1056, %v1055
    %v1103 = vpack.c.bf16 %v1058, %v1057
    %v1104 = vpack.c.bf16 %v1060, %v1059
    %v1105 = vpack.c.bf16 %v1062, %v1061
    %v1106 = vpack.c.bf16 %v1064, %v1063
    %v1107 = vpack.c.bf16 %v1066, %v1065
    %v1108 = vpack.c.bf16 %v1068, %v1067
    %v1109 = vpack.c.bf16 %v1070, %v1069
    %v1110 = vpack.c.bf16 %v1072, %v1071
    %v1111 = vpack.c.bf16 %v1074, %v1073
    %v1112 = vpack.c.bf16 %v1076, %v1075
    %v1113 = vpack.c.bf16 %v1078, %v1077
    %v1114 = vpack.c.bf16 %v1080, %v1079
    %v1115 = vpack.c.bf16 %v1082, %v1081
    %v1116 = vpack.c.bf16 %v1084, %v1083
    %s1117 = scalar_lea.vmem [#allocation7], 64
    %v1118 = vld [vmem:[%s1117] sm:$0xf]
    %v1119 = vld [vmem:[%s1117 + $0x4] sm:$0xf]
    %v1120 = vld [vmem:[%s1117 + $0x8] sm:$0xf]
    %v1121 = vld [vmem:[%s1117 + $0xc] sm:$0xf]
    %v1122 = vld [vmem:[%s1117 + $0x10] sm:$0xf]
    %v1123 = vld [vmem:[%s1117 + $0x14] sm:$0xf]
    %v1124 = vld [vmem:[%s1117 + $0x18] sm:$0xf]
    %v1125 = vld [vmem:[%s1117 + $0x1c] sm:$0xf]
    %v1126 = vld [vmem:[%s1117 + $0x20] sm:$0xf]
    %v1127 = vld [vmem:[%s1117 + $0x24] sm:$0xf]
    %v1128 = vld [vmem:[%s1117 + $0x28] sm:$0xf]
    %v1129 = vld [vmem:[%s1117 + $0x2c] sm:$0xf]
    %v1130 = vld [vmem:[%s1117 + $0x30] sm:$0xf]
    %v1131 = vld [vmem:[%s1117 + $0x34] sm:$0xf]
    %v1132 = vld [vmem:[%s1117 + $0x38] sm:$0xf]
    %v1133 = vld [vmem:[%s1117 + $0x3c] sm:$0xf]
    %s1134 = scalar_lea.vmem %s4, 1
    %v1135 = vld [vmem:[%s1134] sm:$0x1]
    %v1137 = vperm.slane %v1135, 0
    %v1155 = vunpack.c.l.b16 %v1118
    %v1156 = vunpack.c.l.b16 %v1119
    %v1157 = vunpack.c.l.b16 %v1120
    %v1158 = vunpack.c.l.b16 %v1121
    %v1159 = vunpack.c.l.b16 %v1122
    %v1160 = vunpack.c.l.b16 %v1123
    %v1161 = vunpack.c.l.b16 %v1124
    %v1162 = vunpack.c.l.b16 %v1125
    %v1163 = vunpack.c.l.b16 %v1126
    %v1164 = vunpack.c.l.b16 %v1127
    %v1165 = vunpack.c.l.b16 %v1128
    %v1166 = vunpack.c.l.b16 %v1129
    %v1167 = vunpack.c.l.b16 %v1130
    %v1168 = vunpack.c.l.b16 %v1131
    %v1169 = vunpack.c.l.b16 %v1132
    %v1170 = vunpack.c.l.b16 %v1133
    %v1171 = vpack.c.b16 %v1156, %v1155
    %v1172 = vpack.c.b16 %v1158, %v1157
    %v1173 = vpack.c.b16 %v1160, %v1159
    %v1174 = vpack.c.b16 %v1162, %v1161
    %v1175 = vpack.c.b16 %v1164, %v1163
    %v1176 = vpack.c.b16 %v1166, %v1165
    %v1177 = vpack.c.b16 %v1168, %v1167
    %v1178 = vpack.c.b16 %v1170, %v1169
    %1187 = vmatpush.bf16.msra.mxu0 %v1178
    %1188 = vmatpush.bf16.msra.mxu0 %v1177
    %1189 = vmatpush.bf16.msra.mxu0 %v1176
    %1190 = vmatpush.bf16.msra.mxu0 %v1175
    %1191 = vmatpush.bf16.msra.mxu0 %v1174
    %1192 = vmatpush.bf16.msra.mxu0 %v1173
    %1193 = vmatpush.bf16.msra.mxu0 %v1172
    %1194 = vmatpush.bf16.msra.mxu0 %v1171
    %1195 = vmatmul.bf16.gmra.mxu0 %v1085
    %v1196 = vpop.f32.mrf.mxu0
    %v1197 = vadd.f32 %v1137, %v1196
    %v1198 = vpop.f32.mrf.mxu0
    %v1199 = vadd.f32 %v1137, %v1198
    %1200 = vmatmul.bf16.gmra.mxu0 %v1086
    %v1201 = vpop.f32.mrf.mxu0
    %v1202 = vadd.f32 %v1137, %v1201
    %v1203 = vpop.f32.mrf.mxu0
    %v1204 = vadd.f32 %v1137, %v1203
    %1205 = vmatmul.bf16.gmra.mxu0 %v1087
    %v1206 = vpop.f32.mrf.mxu0
    %v1207 = vadd.f32 %v1137, %v1206
    %v1208 = vpop.f32.mrf.mxu0
    %v1209 = vadd.f32 %v1137, %v1208
    %1210 = vmatmul.bf16.gmra.mxu0 %v1088
    %v1211 = vpop.f32.mrf.mxu0
    %v1212 = vadd.f32 %v1137, %v1211
    %v1213 = vpop.f32.mrf.mxu0
    %v1214 = vadd.f32 %v1137, %v1213
    %1215 = vmatmul.bf16.gmra.mxu0 %v1089
    %v1216 = vpop.f32.mrf.mxu0
    %v1217 = vadd.f32 %v1137, %v1216
    %v1218 = vpop.f32.mrf.mxu0
    %v1219 = vadd.f32 %v1137, %v1218
    %1220 = vmatmul.bf16.gmra.mxu0 %v1090
    %v1221 = vpop.f32.mrf.mxu0
    %v1222 = vadd.f32 %v1137, %v1221
    %v1223 = vpop.f32.mrf.mxu0
    %v1224 = vadd.f32 %v1137, %v1223
    %1225 = vmatmul.bf16.gmra.mxu0 %v1091
    %v1226 = vpop.f32.mrf.mxu0
    %v1227 = vadd.f32 %v1137, %v1226
    %v1228 = vpop.f32.mrf.mxu0
    %v1229 = vadd.f32 %v1137, %v1228
    %1230 = vmatmul.bf16.gmra.mxu0 %v1092
    %v1231 = vpop.f32.mrf.mxu0
    %v1232 = vadd.f32 %v1137, %v1231
    %v1233 = vpop.f32.mrf.mxu0
    %v1234 = vadd.f32 %v1137, %v1233
    %1235 = vmatmul.bf16.gmra.mxu0 %v1093
    %v1236 = vpop.f32.mrf.mxu0
    %v1237 = vadd.f32 %v1137, %v1236
    %v1238 = vpop.f32.mrf.mxu0
    %v1239 = vadd.f32 %v1137, %v1238
    %1240 = vmatmul.bf16.gmra.mxu0 %v1094
    %v1241 = vpop.f32.mrf.mxu0
    %v1242 = vadd.f32 %v1137, %v1241
    %v1243 = vpop.f32.mrf.mxu0
    %v1244 = vadd.f32 %v1137, %v1243
    %1245 = vmatmul.bf16.gmra.mxu0 %v1095
    %v1246 = vpop.f32.mrf.mxu0
    %v1247 = vadd.f32 %v1137, %v1246
    %v1248 = vpop.f32.mrf.mxu0
    %v1249 = vadd.f32 %v1137, %v1248
    %1250 = vmatmul.bf16.gmra.mxu0 %v1096
    %v1251 = vpop.f32.mrf.mxu0
    %v1252 = vadd.f32 %v1137, %v1251
    %v1253 = vpop.f32.mrf.mxu0
    %v1254 = vadd.f32 %v1137, %v1253
    %1255 = vmatmul.bf16.gmra.mxu0 %v1097
    %v1256 = vpop.f32.mrf.mxu0
    %v1257 = vadd.f32 %v1137, %v1256
    %v1258 = vpop.f32.mrf.mxu0
    %v1259 = vadd.f32 %v1137, %v1258
    %1260 = vmatmul.bf16.gmra.mxu0 %v1098
    %v1261 = vpop.f32.mrf.mxu0
    %v1262 = vadd.f32 %v1137, %v1261
    %v1263 = vpop.f32.mrf.mxu0
    %v1264 = vadd.f32 %v1137, %v1263
    %1265 = vmatmul.bf16.gmra.mxu0 %v1099
    %v1266 = vpop.f32.mrf.mxu0
    %v1267 = vadd.f32 %v1137, %v1266
    %v1268 = vpop.f32.mrf.mxu0
    %v1269 = vadd.f32 %v1137, %v1268
    %1270 = vmatmul.bf16.gmra.mxu0 %v1100
    %v1271 = vpop.f32.mrf.mxu0
    %v1272 = vadd.f32 %v1137, %v1271
    %v1273 = vpop.f32.mrf.mxu0
    %v1274 = vadd.f32 %v1137, %v1273
    %1275 = vmatmul.bf16.gmra.mxu0 %v1101
    %v1276 = vpop.f32.mrf.mxu0
    %v1277 = vadd.f32 %v1137, %v1276
    %v1278 = vpop.f32.mrf.mxu0
    %v1279 = vadd.f32 %v1137, %v1278
    %1280 = vmatmul.bf16.gmra.mxu0 %v1102
    %v1281 = vpop.f32.mrf.mxu0
    %v1282 = vadd.f32 %v1137, %v1281
    %v1283 = vpop.f32.mrf.mxu0
    %v1284 = vadd.f32 %v1137, %v1283
    %1285 = vmatmul.bf16.gmra.mxu0 %v1103
    %v1286 = vpop.f32.mrf.mxu0
    %v1287 = vadd.f32 %v1137, %v1286
    %v1288 = vpop.f32.mrf.mxu0
    %v1289 = vadd.f32 %v1137, %v1288
    %1290 = vmatmul.bf16.gmra.mxu0 %v1104
    %v1291 = vpop.f32.mrf.mxu0
    %v1292 = vadd.f32 %v1137, %v1291
    %v1293 = vpop.f32.mrf.mxu0
    %v1294 = vadd.f32 %v1137, %v1293
    %1295 = vmatmul.bf16.gmra.mxu0 %v1105
    %v1296 = vpop.f32.mrf.mxu0
    %v1297 = vadd.f32 %v1137, %v1296
    %v1298 = vpop.f32.mrf.mxu0
    %v1299 = vadd.f32 %v1137, %v1298
    %1300 = vmatmul.bf16.gmra.mxu0 %v1106
    %v1301 = vpop.f32.mrf.mxu0
    %v1302 = vadd.f32 %v1137, %v1301
    %v1303 = vpop.f32.mrf.mxu0
    %v1304 = vadd.f32 %v1137, %v1303
    %1305 = vmatmul.bf16.gmra.mxu0 %v1107
    %v1306 = vpop.f32.mrf.mxu0
    %v1307 = vadd.f32 %v1137, %v1306
    %v1308 = vpop.f32.mrf.mxu0
    %v1309 = vadd.f32 %v1137, %v1308
    %1310 = vmatmul.bf16.gmra.mxu0 %v1108
    %v1311 = vpop.f32.mrf.mxu0
    %v1312 = vadd.f32 %v1137, %v1311
    %v1313 = vpop.f32.mrf.mxu0
    %v1314 = vadd.f32 %v1137, %v1313
    %1315 = vmatmul.bf16.gmra.mxu0 %v1109
    %v1316 = vpop.f32.mrf.mxu0
    %v1317 = vadd.f32 %v1137, %v1316
    %v1318 = vpop.f32.mrf.mxu0
    %v1319 = vadd.f32 %v1137, %v1318
    %1320 = vmatmul.bf16.gmra.mxu0 %v1110
    %v1321 = vpop.f32.mrf.mxu0
    %v1322 = vadd.f32 %v1137, %v1321
    %v1323 = vpop.f32.mrf.mxu0
    %v1324 = vadd.f32 %v1137, %v1323
    %1325 = vmatmul.bf16.gmra.mxu0 %v1111
    %v1326 = vpop.f32.mrf.mxu0
    %v1327 = vadd.f32 %v1137, %v1326
    %v1328 = vpop.f32.mrf.mxu0
    %v1329 = vadd.f32 %v1137, %v1328
    %1330 = vmatmul.bf16.gmra.mxu0 %v1112
    %v1331 = vpop.f32.mrf.mxu0
    %v1332 = vadd.f32 %v1137, %v1331
    %v1333 = vpop.f32.mrf.mxu0
    %v1334 = vadd.f32 %v1137, %v1333
    %1335 = vmatmul.bf16.gmra.mxu0 %v1113
    %v1336 = vpop.f32.mrf.mxu0
    %v1337 = vadd.f32 %v1137, %v1336
    %v1338 = vpop.f32.mrf.mxu0
    %v1339 = vadd.f32 %v1137, %v1338
    %1340 = vmatmul.bf16.gmra.mxu0 %v1114
    %v1341 = vpop.f32.mrf.mxu0
    %v1342 = vadd.f32 %v1137, %v1341
    %v1343 = vpop.f32.mrf.mxu0
    %v1344 = vadd.f32 %v1137, %v1343
    %1345 = vmatmul.bf16.gmra.mxu0 %v1115
    %v1346 = vpop.f32.mrf.mxu0
    %v1347 = vadd.f32 %v1137, %v1346
    %v1348 = vpop.f32.mrf.mxu0
    %v1349 = vadd.f32 %v1137, %v1348
    %1350 = vmatmul.bf16.gmra.mxu0 %v1116
    %v1351 = vpop.f32.mrf.mxu0
    %v1352 = vadd.f32 %v1137, %v1351
    %v1353 = vpop.f32.mrf.mxu0
    %v1354 = vadd.f32 %v1137, %v1353
    %1355 = vdwg.mxu0
    %v1356 = vmax.f32 %v1197, 0.0
    %v1357 = vmax.f32 %v1199, 0.0
    %v1358 = vmax.f32 %v1202, 0.0
    %v1359 = vmax.f32 %v1204, 0.0
    %v1360 = vmax.f32 %v1207, 0.0
    %v1361 = vmax.f32 %v1209, 0.0
    %v1362 = vmax.f32 %v1212, 0.0
    %v1363 = vmax.f32 %v1214, 0.0
    %v1364 = vmax.f32 %v1217, 0.0
    %v1365 = vmax.f32 %v1219, 0.0
    %v1366 = vmax.f32 %v1222, 0.0
    %v1367 = vmax.f32 %v1224, 0.0
    %v1368 = vmax.f32 %v1227, 0.0
    %v1369 = vmax.f32 %v1229, 0.0
    %v1370 = vmax.f32 %v1232, 0.0
    %v1371 = vmax.f32 %v1234, 0.0
    %v1372 = vmax.f32 %v1237, 0.0
    %v1373 = vmax.f32 %v1239, 0.0
    %v1374 = vmax.f32 %v1242, 0.0
    %v1375 = vmax.f32 %v1244, 0.0
    %v1376 = vmax.f32 %v1247, 0.0
    %v1377 = vmax.f32 %v1249, 0.0
    %v1378 = vmax.f32 %v1252, 0.0
    %v1379 = vmax.f32 %v1254, 0.0
    %v1380 = vmax.f32 %v1257, 0.0
    %v1381 = vmax.f32 %v1259, 0.0
    %v1382 = vmax.f32 %v1262, 0.0
    %v1383 = vmax.f32 %v1264, 0.0
    %v1384 = vmax.f32 %v1267, 0.0
    %v1385 = vmax.f32 %v1269, 0.0
    %v1386 = vmax.f32 %v1272, 0.0
    %v1387 = vmax.f32 %v1274, 0.0
    %v1388 = vmax.f32 %v1277, 0.0
    %v1389 = vmax.f32 %v1279, 0.0
    %v1390 = vmax.f32 %v1282, 0.0
    %v1391 = vmax.f32 %v1284, 0.0
    %v1392 = vmax.f32 %v1287, 0.0
    %v1393 = vmax.f32 %v1289, 0.0
    %v1394 = vmax.f32 %v1292, 0.0
    %v1395 = vmax.f32 %v1294, 0.0
    %v1396 = vmax.f32 %v1297, 0.0
    %v1397 = vmax.f32 %v1299, 0.0
    %v1398 = vmax.f32 %v1302, 0.0
    %v1399 = vmax.f32 %v1304, 0.0
    %v1400 = vmax.f32 %v1307, 0.0
    %v1401 = vmax.f32 %v1309, 0.0
    %v1402 = vmax.f32 %v1312, 0.0
    %v1403 = vmax.f32 %v1314, 0.0
    %v1404 = vmax.f32 %v1317, 0.0
    %v1405 = vmax.f32 %v1319, 0.0
    %v1406 = vmax.f32 %v1322, 0.0
    %v1407 = vmax.f32 %v1324, 0.0
    %v1408 = vmax.f32 %v1327, 0.0
    %v1409 = vmax.f32 %v1329, 0.0
    %v1410 = vmax.f32 %v1332, 0.0
    %v1411 = vmax.f32 %v1334, 0.0
    %v1412 = vmax.f32 %v1337, 0.0
    %v1413 = vmax.f32 %v1339, 0.0
    %v1414 = vmax.f32 %v1342, 0.0
    %v1415 = vmax.f32 %v1344, 0.0
    %v1416 = vmax.f32 %v1347, 0.0
    %v1417 = vmax.f32 %v1349, 0.0
    %v1418 = vmax.f32 %v1352, 0.0
    %v1419 = vmax.f32 %v1354, 0.0
    %v1420 = vpack.c.bf16 %v1357, %v1356
    %v1421 = vpack.c.bf16 %v1359, %v1358
    %v1422 = vpack.c.bf16 %v1361, %v1360
    %v1423 = vpack.c.bf16 %v1363, %v1362
    %v1424 = vpack.c.bf16 %v1365, %v1364
    %v1425 = vpack.c.bf16 %v1367, %v1366
    %v1426 = vpack.c.bf16 %v1369, %v1368
    %v1427 = vpack.c.bf16 %v1371, %v1370
    %v1428 = vpack.c.bf16 %v1373, %v1372
    %v1429 = vpack.c.bf16 %v1375, %v1374
    %v1430 = vpack.c.bf16 %v1377, %v1376
    %v1431 = vpack.c.bf16 %v1379, %v1378
    %v1432 = vpack.c.bf16 %v1381, %v1380
    %v1433 = vpack.c.bf16 %v1383, %v1382
    %v1434 = vpack.c.bf16 %v1385, %v1384
    %v1435 = vpack.c.bf16 %v1387, %v1386
    %v1436 = vpack.c.bf16 %v1389, %v1388
    %v1437 = vpack.c.bf16 %v1391, %v1390
    %v1438 = vpack.c.bf16 %v1393, %v1392
    %v1439 = vpack.c.bf16 %v1395, %v1394
    %v1440 = vpack.c.bf16 %v1397, %v1396
    %v1441 = vpack.c.bf16 %v1399, %v1398
    %v1442 = vpack.c.bf16 %v1401, %v1400
    %v1443 = vpack.c.bf16 %v1403, %v1402
    %v1444 = vpack.c.bf16 %v1405, %v1404
    %v1445 = vpack.c.bf16 %v1407, %v1406
    %v1446 = vpack.c.bf16 %v1409, %v1408
    %v1447 = vpack.c.bf16 %v1411, %v1410
    %v1448 = vpack.c.bf16 %v1413, %v1412
    %v1449 = vpack.c.bf16 %v1415, %v1414
    %v1450 = vpack.c.bf16 %v1417, %v1416
    %v1451 = vpack.c.bf16 %v1419, %v1418
    %v1452 = vld [vmem:[#allocation8] sm:$0xf]
    %v1453 = vld [vmem:[#allocation8 + $0x4] sm:$0xf]
    %v1454 = vld [vmem:[#allocation8 + $0x8] sm:$0xf]
    %v1455 = vld [vmem:[#allocation8 + $0xc] sm:$0xf]
    %v1456 = vld [vmem:[#allocation8 + $0x10] sm:$0xf]
    %v1457 = vld [vmem:[#allocation8 + $0x14] sm:$0xf]
    %v1458 = vld [vmem:[#allocation8 + $0x18] sm:$0xf]
    %v1459 = vld [vmem:[#allocation8 + $0x1c] sm:$0xf]
    %v1460 = vld [vmem:[#allocation8 + $0x20] sm:$0xf]
    %v1461 = vld [vmem:[#allocation8 + $0x24] sm:$0xf]
    %v1462 = vld [vmem:[#allocation8 + $0x28] sm:$0xf]
    %v1463 = vld [vmem:[#allocation8 + $0x2c] sm:$0xf]
    %v1464 = vld [vmem:[#allocation8 + $0x30] sm:$0xf]
    %v1465 = vld [vmem:[#allocation8 + $0x34] sm:$0xf]
    %v1466 = vld [vmem:[#allocation8 + $0x38] sm:$0xf]
    %v1467 = vld [vmem:[#allocation8 + $0x3c] sm:$0xf]
    %v1468 = vld [vmem:[%s6] sm:$0x1]
    %v1470 = vperm.slane %v1468, 0
    %v1488 = vunpack.c.l.b16 %v1452
    %v1489 = vunpack.c.l.b16 %v1453
    %v1490 = vunpack.c.l.b16 %v1454
    %v1491 = vunpack.c.l.b16 %v1455
    %v1492 = vunpack.c.l.b16 %v1456
    %v1493 = vunpack.c.l.b16 %v1457
    %v1494 = vunpack.c.l.b16 %v1458
    %v1495 = vunpack.c.l.b16 %v1459
    %v1496 = vunpack.c.l.b16 %v1460
    %v1497 = vunpack.c.l.b16 %v1461
    %v1498 = vunpack.c.l.b16 %v1462
    %v1499 = vunpack.c.l.b16 %v1463
    %v1500 = vunpack.c.l.b16 %v1464
    %v1501 = vunpack.c.l.b16 %v1465
    %v1502 = vunpack.c.l.b16 %v1466
    %v1503 = vunpack.c.l.b16 %v1467
    %v1504 = vpack.c.b16 %v1489, %v1488
    %v1505 = vpack.c.b16 %v1491, %v1490
    %v1506 = vpack.c.b16 %v1493, %v1492
    %v1507 = vpack.c.b16 %v1495, %v1494
    %v1508 = vpack.c.b16 %v1497, %v1496
    %v1509 = vpack.c.b16 %v1499, %v1498
    %v1510 = vpack.c.b16 %v1501, %v1500
    %v1511 = vpack.c.b16 %v1503, %v1502
    %1520 = vmatpush.bf16.msra.mxu0 %v1511
    %1521 = vmatpush.bf16.msra.mxu0 %v1510
    %1522 = vmatpush.bf16.msra.mxu0 %v1509
    %1523 = vmatpush.bf16.msra.mxu0 %v1508
    %1524 = vmatpush.bf16.msra.mxu0 %v1507
    %1525 = vmatpush.bf16.msra.mxu0 %v1506
    %1526 = vmatpush.bf16.msra.mxu0 %v1505
    %1527 = vmatpush.bf16.msra.mxu0 %v1504
    %1528 = vmatmul.bf16.gmra.mxu0 %v1420
    %v1529 = vpop.f32.mrf.mxu0
    %v1530 = vadd.f32 %v1470, %v1529
    %v1531 = vpop.f32.mrf.mxu0
    %v1532 = vadd.f32 %v1470, %v1531
    %1533 = vmatmul.bf16.gmra.mxu0 %v1421
    %v1534 = vpop.f32.mrf.mxu0
    %v1535 = vadd.f32 %v1470, %v1534
    %v1536 = vpop.f32.mrf.mxu0
    %v1537 = vadd.f32 %v1470, %v1536
    %1538 = vmatmul.bf16.gmra.mxu0 %v1422
    %v1539 = vpop.f32.mrf.mxu0
    %v1540 = vadd.f32 %v1470, %v1539
    %v1541 = vpop.f32.mrf.mxu0
    %v1542 = vadd.f32 %v1470, %v1541
    %1543 = vmatmul.bf16.gmra.mxu0 %v1423
    %v1544 = vpop.f32.mrf.mxu0
    %v1545 = vadd.f32 %v1470, %v1544
    %v1546 = vpop.f32.mrf.mxu0
    %v1547 = vadd.f32 %v1470, %v1546
    %1548 = vmatmul.bf16.gmra.mxu0 %v1424
    %v1549 = vpop.f32.mrf.mxu0
    %v1550 = vadd.f32 %v1470, %v1549
    %v1551 = vpop.f32.mrf.mxu0
    %v1552 = vadd.f32 %v1470, %v1551
    %1553 = vmatmul.bf16.gmra.mxu0 %v1425
    %v1554 = vpop.f32.mrf.mxu0
    %v1555 = vadd.f32 %v1470, %v1554
    %v1556 = vpop.f32.mrf.mxu0
    %v1557 = vadd.f32 %v1470, %v1556
    %1558 = vmatmul.bf16.gmra.mxu0 %v1426
    %v1559 = vpop.f32.mrf.mxu0
    %v1560 = vadd.f32 %v1470, %v1559
    %v1561 = vpop.f32.mrf.mxu0
    %v1562 = vadd.f32 %v1470, %v1561
    %1563 = vmatmul.bf16.gmra.mxu0 %v1427
    %v1564 = vpop.f32.mrf.mxu0
    %v1565 = vadd.f32 %v1470, %v1564
    %v1566 = vpop.f32.mrf.mxu0
    %v1567 = vadd.f32 %v1470, %v1566
    %1568 = vmatmul.bf16.gmra.mxu0 %v1428
    %v1569 = vpop.f32.mrf.mxu0
    %v1570 = vadd.f32 %v1470, %v1569
    %v1571 = vpop.f32.mrf.mxu0
    %v1572 = vadd.f32 %v1470, %v1571
    %1573 = vmatmul.bf16.gmra.mxu0 %v1429
    %v1574 = vpop.f32.mrf.mxu0
    %v1575 = vadd.f32 %v1470, %v1574
    %v1576 = vpop.f32.mrf.mxu0
    %v1577 = vadd.f32 %v1470, %v1576
    %1578 = vmatmul.bf16.gmra.mxu0 %v1430
    %v1579 = vpop.f32.mrf.mxu0
    %v1580 = vadd.f32 %v1470, %v1579
    %v1581 = vpop.f32.mrf.mxu0
    %v1582 = vadd.f32 %v1470, %v1581
    %1583 = vmatmul.bf16.gmra.mxu0 %v1431
    %v1584 = vpop.f32.mrf.mxu0
    %v1585 = vadd.f32 %v1470, %v1584
    %v1586 = vpop.f32.mrf.mxu0
    %v1587 = vadd.f32 %v1470, %v1586
    %1588 = vmatmul.bf16.gmra.mxu0 %v1432
    %v1589 = vpop.f32.mrf.mxu0
    %v1590 = vadd.f32 %v1470, %v1589
    %v1591 = vpop.f32.mrf.mxu0
    %v1592 = vadd.f32 %v1470, %v1591
    %1593 = vmatmul.bf16.gmra.mxu0 %v1433
    %v1594 = vpop.f32.mrf.mxu0
    %v1595 = vadd.f32 %v1470, %v1594
    %v1596 = vpop.f32.mrf.mxu0
    %v1597 = vadd.f32 %v1470, %v1596
    %1598 = vmatmul.bf16.gmra.mxu0 %v1434
    %v1599 = vpop.f32.mrf.mxu0
    %v1600 = vadd.f32 %v1470, %v1599
    %v1601 = vpop.f32.mrf.mxu0
    %v1602 = vadd.f32 %v1470, %v1601
    %1603 = vmatmul.bf16.gmra.mxu0 %v1435
    %v1604 = vpop.f32.mrf.mxu0
    %v1605 = vadd.f32 %v1470, %v1604
    %v1606 = vpop.f32.mrf.mxu0
    %v1607 = vadd.f32 %v1470, %v1606
    %1608 = vmatmul.bf16.gmra.mxu0 %v1436
    %v1609 = vpop.f32.mrf.mxu0
    %v1610 = vadd.f32 %v1470, %v1609
    %v1611 = vpop.f32.mrf.mxu0
    %v1612 = vadd.f32 %v1470, %v1611
    %1613 = vmatmul.bf16.gmra.mxu0 %v1437
    %v1614 = vpop.f32.mrf.mxu0
    %v1615 = vadd.f32 %v1470, %v1614
    %v1616 = vpop.f32.mrf.mxu0
    %v1617 = vadd.f32 %v1470, %v1616
    %1618 = vmatmul.bf16.gmra.mxu0 %v1438
    %v1619 = vpop.f32.mrf.mxu0
    %v1620 = vadd.f32 %v1470, %v1619
    %v1621 = vpop.f32.mrf.mxu0
    %v1622 = vadd.f32 %v1470, %v1621
    %1623 = vmatmul.bf16.gmra.mxu0 %v1439
    %v1624 = vpop.f32.mrf.mxu0
    %v1625 = vadd.f32 %v1470, %v1624
    %v1626 = vpop.f32.mrf.mxu0
    %v1627 = vadd.f32 %v1470, %v1626
    %1628 = vmatmul.bf16.gmra.mxu0 %v1440
    %v1629 = vpop.f32.mrf.mxu0
    %v1630 = vadd.f32 %v1470, %v1629
    %v1631 = vpop.f32.mrf.mxu0
    %v1632 = vadd.f32 %v1470, %v1631
    %1633 = vmatmul.bf16.gmra.mxu0 %v1441
    %v1634 = vpop.f32.mrf.mxu0
    %v1635 = vadd.f32 %v1470, %v1634
    %v1636 = vpop.f32.mrf.mxu0
    %v1637 = vadd.f32 %v1470, %v1636
    %1638 = vmatmul.bf16.gmra.mxu0 %v1442
    %v1639 = vpop.f32.mrf.mxu0
    %v1640 = vadd.f32 %v1470, %v1639
    %v1641 = vpop.f32.mrf.mxu0
    %v1642 = vadd.f32 %v1470, %v1641
    %1643 = vmatmul.bf16.gmra.mxu0 %v1443
    %v1644 = vpop.f32.mrf.mxu0
    %v1645 = vadd.f32 %v1470, %v1644
    %v1646 = vpop.f32.mrf.mxu0
    %v1647 = vadd.f32 %v1470, %v1646
    %1648 = vmatmul.bf16.gmra.mxu0 %v1444
    %v1649 = vpop.f32.mrf.mxu0
    %v1650 = vadd.f32 %v1470, %v1649
    %v1651 = vpop.f32.mrf.mxu0
    %v1652 = vadd.f32 %v1470, %v1651
    %1653 = vmatmul.bf16.gmra.mxu0 %v1445
    %v1654 = vpop.f32.mrf.mxu0
    %v1655 = vadd.f32 %v1470, %v1654
    %v1656 = vpop.f32.mrf.mxu0
    %v1657 = vadd.f32 %v1470, %v1656
    %1658 = vmatmul.bf16.gmra.mxu0 %v1446
    %v1659 = vpop.f32.mrf.mxu0
    %v1660 = vadd.f32 %v1470, %v1659
    %v1661 = vpop.f32.mrf.mxu0
    %v1662 = vadd.f32 %v1470, %v1661
    %1663 = vmatmul.bf16.gmra.mxu0 %v1447
    %v1664 = vpop.f32.mrf.mxu0
    %v1665 = vadd.f32 %v1470, %v1664
    %v1666 = vpop.f32.mrf.mxu0
    %v1667 = vadd.f32 %v1470, %v1666
    %1668 = vmatmul.bf16.gmra.mxu0 %v1448
    %v1669 = vpop.f32.mrf.mxu0
    %v1670 = vadd.f32 %v1470, %v1669
    %v1671 = vpop.f32.mrf.mxu0
    %v1672 = vadd.f32 %v1470, %v1671
    %1673 = vmatmul.bf16.gmra.mxu0 %v1449
    %v1674 = vpop.f32.mrf.mxu0
    %v1675 = vadd.f32 %v1470, %v1674
    %v1676 = vpop.f32.mrf.mxu0
    %v1677 = vadd.f32 %v1470, %v1676
    %1678 = vmatmul.bf16.gmra.mxu0 %v1450
    %v1679 = vpop.f32.mrf.mxu0
    %v1680 = vadd.f32 %v1470, %v1679
    %v1681 = vpop.f32.mrf.mxu0
    %v1682 = vadd.f32 %v1470, %v1681
    %1683 = vmatmul.bf16.gmra.mxu0 %v1451
    %v1684 = vpop.f32.mrf.mxu0
    %v1685 = vadd.f32 %v1470, %v1684
    %v1686 = vpop.f32.mrf.mxu0
    %v1687 = vadd.f32 %v1470, %v1686
    %1688 = vdwg.mxu0
    %v1689 = vpack.c.bf16 %v1530, %v1530
    %v1690 = vpack.c.bf16 %v1532, %v1532
    %v1691 = vpack.c.bf16 %v1535, %v1535
    %v1692 = vpack.c.bf16 %v1537, %v1537
    %v1693 = vpack.c.bf16 %v1540, %v1540
    %v1694 = vpack.c.bf16 %v1542, %v1542
    %v1695 = vpack.c.bf16 %v1545, %v1545
    %v1696 = vpack.c.bf16 %v1547, %v1547
    %v1697 = vpack.c.bf16 %v1550, %v1550
    %v1698 = vpack.c.bf16 %v1552, %v1552
    %v1699 = vpack.c.bf16 %v1555, %v1555
    %v1700 = vpack.c.bf16 %v1557, %v1557
    %v1701 = vpack.c.bf16 %v1560, %v1560
    %v1702 = vpack.c.bf16 %v1562, %v1562
    %v1703 = vpack.c.bf16 %v1565, %v1565
    %v1704 = vpack.c.bf16 %v1567, %v1567
    %v1705 = vpack.c.bf16 %v1570, %v1570
    %v1706 = vpack.c.bf16 %v1572, %v1572
    %v1707 = vpack.c.bf16 %v1575, %v1575
    %v1708 = vpack.c.bf16 %v1577, %v1577
    %v1709 = vpack.c.bf16 %v1580, %v1580
    %v1710 = vpack.c.bf16 %v1582, %v1582
    %v1711 = vpack.c.bf16 %v1585, %v1585
    %v1712 = vpack.c.bf16 %v1587, %v1587
    %v1713 = vpack.c.bf16 %v1590, %v1590
    %v1714 = vpack.c.bf16 %v1592, %v1592
    %v1715 = vpack.c.bf16 %v1595, %v1595
    %v1716 = vpack.c.bf16 %v1597, %v1597
    %v1717 = vpack.c.bf16 %v1600, %v1600
    %v1718 = vpack.c.bf16 %v1602, %v1602
    %v1719 = vpack.c.bf16 %v1605, %v1605
    %v1720 = vpack.c.bf16 %v1607, %v1607
    %v1721 = vpack.c.bf16 %v1610, %v1610
    %v1722 = vpack.c.bf16 %v1612, %v1612
    %v1723 = vpack.c.bf16 %v1615, %v1615
    %v1724 = vpack.c.bf16 %v1617, %v1617
    %v1725 = vpack.c.bf16 %v1620, %v1620
    %v1726 = vpack.c.bf16 %v1622, %v1622
    %v1727 = vpack.c.bf16 %v1625, %v1625
    %v1728 = vpack.c.bf16 %v1627, %v1627
    %v1729 = vpack.c.bf16 %v1630, %v1630
    %v1730 = vpack.c.bf16 %v1632, %v1632
    %v1731 = vpack.c.bf16 %v1635, %v1635
    %v1732 = vpack.c.bf16 %v1637, %v1637
    %v1733 = vpack.c.bf16 %v1640, %v1640
    %v1734 = vpack.c.bf16 %v1642, %v1642
    %v1735 = vpack.c.bf16 %v1645, %v1645
    %v1736 = vpack.c.bf16 %v1647, %v1647
    %v1737 = vpack.c.bf16 %v1650, %v1650
    %v1738 = vpack.c.bf16 %v1652, %v1652
    %v1739 = vpack.c.bf16 %v1655, %v1655
    %v1740 = vpack.c.bf16 %v1657, %v1657
    %v1741 = vpack.c.bf16 %v1660, %v1660
    %v1742 = vpack.c.bf16 %v1662, %v1662
    %v1743 = vpack.c.bf16 %v1665, %v1665
    %v1744 = vpack.c.bf16 %v1667, %v1667
    %v1745 = vpack.c.bf16 %v1670, %v1670
    %v1746 = vpack.c.bf16 %v1672, %v1672
    %v1747 = vpack.c.bf16 %v1675, %v1675
    %v1748 = vpack.c.bf16 %v1677, %v1677
    %v1749 = vpack.c.bf16 %v1680, %v1680
    %v1750 = vpack.c.bf16 %v1682, %v1682
    %v1751 = vpack.c.bf16 %v1685, %v1685
    %v1752 = vpack.c.bf16 %v1687, %v1687
    %1753 = vst [vmem:[#allocation10] sm:$0xf] %v1689
    %1754 = vst [vmem:[#allocation10 + $0x4] sm:$0xf] %v1690
    %1755 = vst [vmem:[#allocation10 + $0x8] sm:$0xf] %v1691
    %1756 = vst [vmem:[#allocation10 + $0xc] sm:$0xf] %v1692
    %1757 = vst [vmem:[#allocation10 + $0x10] sm:$0xf] %v1693
    %1758 = vst [vmem:[#allocation10 + $0x14] sm:$0xf] %v1694
    %1759 = vst [vmem:[#allocation10 + $0x18] sm:$0xf] %v1695
    %1760 = vst [vmem:[#allocation10 + $0x1c] sm:$0xf] %v1696
    %1761 = vst [vmem:[#allocation10 + $0x20] sm:$0xf] %v1697
    %1762 = vst [vmem:[#allocation10 + $0x24] sm:$0xf] %v1698
    %1763 = vst [vmem:[#allocation10 + $0x28] sm:$0xf] %v1699
    %1764 = vst [vmem:[#allocation10 + $0x2c] sm:$0xf] %v1700
    %1765 = vst [vmem:[#allocation10 + $0x30] sm:$0xf] %v1701
    %1766 = vst [vmem:[#allocation10 + $0x34] sm:$0xf] %v1702
    %1767 = vst [vmem:[#allocation10 + $0x38] sm:$0xf] %v1703
    %1768 = vst [vmem:[#allocation10 + $0x3c] sm:$0xf] %v1704
    %1769 = vst [vmem:[#allocation10 + $0x40] sm:$0xf] %v1705
    %1770 = vst [vmem:[#allocation10 + $0x44] sm:$0xf] %v1706
    %1771 = vst [vmem:[#allocation10 + $0x48] sm:$0xf] %v1707
    %1772 = vst [vmem:[#allocation10 + $0x4c] sm:$0xf] %v1708
    %1773 = vst [vmem:[#allocation10 + $0x50] sm:$0xf] %v1709
    %1774 = vst [vmem:[#allocation10 + $0x54] sm:$0xf] %v1710
    %1775 = vst [vmem:[#allocation10 + $0x58] sm:$0xf] %v1711
    %1776 = vst [vmem:[#allocation10 + $0x5c] sm:$0xf] %v1712
    %1777 = vst [vmem:[#allocation10 + $0x60] sm:$0xf] %v1713
    %1778 = vst [vmem:[#allocation10 + $0x64] sm:$0xf] %v1714
    %1779 = vst [vmem:[#allocation10 + $0x68] sm:$0xf] %v1715
    %1780 = vst [vmem:[#allocation10 + $0x6c] sm:$0xf] %v1716
    %1781 = vst [vmem:[#allocation10 + $0x70] sm:$0xf] %v1717
    %1782 = vst [vmem:[#allocation10 + $0x74] sm:$0xf] %v1718
    %1783 = vst [vmem:[#allocation10 + $0x78] sm:$0xf] %v1719
    %1784 = vst [vmem:[#allocation10 + $0x7c] sm:$0xf] %v1720
    %1785 = vst [vmem:[#allocation10 + $0x80] sm:$0xf] %v1721
    %1786 = vst [vmem:[#allocation10 + $0x84] sm:$0xf] %v1722
    %1787 = vst [vmem:[#allocation10 + $0x88] sm:$0xf] %v1723
    %1788 = vst [vmem:[#allocation10 + $0x8c] sm:$0xf] %v1724
    %1789 = vst [vmem:[#allocation10 + $0x90] sm:$0xf] %v1725
    %1790 = vst [vmem:[#allocation10 + $0x94] sm:$0xf] %v1726
    %1791 = vst [vmem:[#allocation10 + $0x98] sm:$0xf] %v1727
    %1792 = vst [vmem:[#allocation10 + $0x9c] sm:$0xf] %v1728
    %1793 = vst [vmem:[#allocation10 + $0xa0] sm:$0xf] %v1729
    %1794 = vst [vmem:[#allocation10 + $0xa4] sm:$0xf] %v1730
    %1795 = vst [vmem:[#allocation10 + $0xa8] sm:$0xf] %v1731
    %1796 = vst [vmem:[#allocation10 + $0xac] sm:$0xf] %v1732
    %1797 = vst [vmem:[#allocation10 + $0xb0] sm:$0xf] %v1733
    %1798 = vst [vmem:[#allocation10 + $0xb4] sm:$0xf] %v1734
    %1799 = vst [vmem:[#allocation10 + $0xb8] sm:$0xf] %v1735
    %1800 = vst [vmem:[#allocation10 + $0xbc] sm:$0xf] %v1736
    %1801 = vst [vmem:[#allocation10 + $0xc0] sm:$0xf] %v1737
    %1802 = vst [vmem:[#allocation10 + $0xc4] sm:$0xf] %v1738
    %1803 = vst [vmem:[#allocation10 + $0xc8] sm:$0xf] %v1739
    %1804 = vst [vmem:[#allocation10 + $0xcc] sm:$0xf] %v1740
    %1805 = vst [vmem:[#allocation10 + $0xd0] sm:$0xf] %v1741
    %1806 = vst [vmem:[#allocation10 + $0xd4] sm:$0xf] %v1742
    %1807 = vst [vmem:[#allocation10 + $0xd8] sm:$0xf] %v1743
    %1808 = vst [vmem:[#allocation10 + $0xdc] sm:$0xf] %v1744
    %1809 = vst [vmem:[#allocation10 + $0xe0] sm:$0xf] %v1745
    %1810 = vst [vmem:[#allocation10 + $0xe4] sm:$0xf] %v1746
    %1811 = vst [vmem:[#allocation10 + $0xe8] sm:$0xf] %v1747
    %1812 = vst [vmem:[#allocation10 + $0xec] sm:$0xf] %v1748
    %1813 = vst [vmem:[#allocation10 + $0xf0] sm:$0xf] %v1749
    %1814 = vst [vmem:[#allocation10 + $0xf4] sm:$0xf] %v1750
    %1815 = vst [vmem:[#allocation10 + $0xf8] sm:$0xf] %v1751
    %1816 = vst [vmem:[#allocation10 + $0xfc] sm:$0xf] %v1752
    // Predicated region
    $region46: #{tpu_custom_call.1} parent=1 // pred_check
      _
    $region47: #{tpu_custom_call.1} parent=1 // pred_check_branch
      %1818 = sbr.rel (0) target = $region49
    $region48: #{tpu_custom_call.1} parent=1 // pred_region
      %1820 = vsyncadd [#allocation4], 0
      %s1821 = sshll.u32 [#allocation10], 4
      %s1822 = int_to_ptr.vmem [resolvable:$true] %s1821
      %s1823 = sshll.u32 %s7, 4
      %s1824 = int_to_ptr.hbm [resolvable:$true] %s1823
      %1829 = dma.vmem_to_hbm [thread:$0]  %s1822, 4096, %s1824, [#allocation4], 64, 64, 4
    $region49: #{tpu_custom_call.1} parent=1 // pred_fallthru
      _
    // Predicated region
    $region50: #{tpu_custom_call.1} parent=1 // pred_check
      _
    $region51: #{tpu_custom_call.1} parent=1 // pred_check_branch
      %1831 = sbr.rel (0) target = $region53
    $region52: #{tpu_custom_call.1} parent=1 // pred_region
      %1833 = dma.done [#allocation4], 4096
    $region53: #{tpu_custom_call.1} parent=1 // pred_fallthru
      _
    %1834 = vsyncpa [#allocation3], 1
    %1835 = vsyncpa [#allocation6], 1
    %1836 = vsyncpa [#allocation9], 1
    %1837 = vsyncpa [#allocation4], 1

</llo_original>
